<compile_context>
chip_gen: v6e
topology: v6e:2x2x1
jax: 0.10.0
libtpu: 0.0.40
codegen_flags: <defaults>
</compile_context>

<pallas_src>
import math

import jax
import jax.numpy as jnp
from jax.experimental import pallas as pl
from jax.experimental.pallas import tpu as pltpu  # noqa: F401

# ----------------------------- config (small) --------------------------------
VOCAB = 64
PAD_IDX = 0
LAYERS = 2
EMBED_DIM = 32
FF_DIM = 64
NUM_HEADS = 2
HEAD_DIM = EMBED_DIM // NUM_HEADS
OUTPUT_DIM = 16
DROPOUT = 0.1          # eval mode -> identity
SEQ = 8
BATCH = 2

# rows of the packed per-layer bias / LayerNorm slab ([8, 3*EMBED_DIM])
_V_BQKV, _V_BO, _V_G1, _V_B1, _V_BF1, _V_BF2, _V_G2, _V_B2 = range(8)


# ----------------------------- shared math helpers ----------------------------
def _ln_affine(x, g, b, eps=1e-5):
    """nn.LayerNorm (affine, eps=1e-5) over the last dim."""
    u = jnp.mean(x, axis=-1, keepdims=True)
    s = jnp.mean((x - u) ** 2, axis=-1, keepdims=True)
    return (x - u) * jax.lax.rsqrt(s + eps) * g + b


def _gelu(x):
    # tanh-approximate GELU (VPU/EUP ops only).
    # TODO(synk): switch to exact erf GELU if the reference MonoEncoder uses F.gelu default.
    c = math.sqrt(2.0 / math.pi)
    return 0.5 * x * (1.0 + jnp.tanh(c * (x + 0.044715 * x * x * x)))


# ------------------------------- fused kernel ---------------------------------
def proj_encoder_kernel(ids_ref, tok_ref, pos_ref,
                        wqkv_ref, wo_ref, w1_ref, w2_ref, vec_ref,
                        wproj_ref, bproj_ref, o_ref):
    # ids_ref  [B, S] int32          tok_ref [B*S, D] (batch-major rows)
    # pos_ref  [S, D]                wqkv    [L, D, 3D]   wo [L, D, D]
    # w1 [L, D, F]  w2 [L, F, D]     vec_ref [L, 8, 3D] packed biases/LN params
    # wproj [D, OUT]  bproj [1, OUT] o_ref   [B, OUT]
    B, S = ids_ref.shape
    N, D = tok_ref.shape
    L = wqkv_ref.shape[0]
    F = w1_ref.shape[2]
    H = NUM_HEADS
    hd = D // H
    scaling = float(hd) ** -0.5

    # pad-key additive bias built in-kernel from the raw ids: [B, 1, S]
    maskb = jnp.where(ids_ref[...] == PAD_IDX, -1e30, 0.0).astype(jnp.float32)
    maskb = maskb[:, None, :]

    # scaled token embedding + sinusoidal positions (tiled over the batch)
    pos = jnp.concatenate([pos_ref[...]] * B, axis=0)              # [N, D]
    x = math.sqrt(D) * tok_ref[...].astype(jnp.float32) + pos      # [N, D]

    for l in range(L):                                             # static layer loop
        vec = vec_ref[l]                                           # [8, 3D]
        bqkv = vec[_V_BQKV:_V_BQKV + 1, :]                         # [1, 3D]
        bo = vec[_V_BO:_V_BO + 1, 0:D]
        g1 = vec[_V_G1:_V_G1 + 1, 0:D]
        b1 = vec[_V_B1:_V_B1 + 1, 0:D]
        bf1 = vec[_V_BF1:_V_BF1 + 1, 0:F]
        bf2 = vec[_V_BF2:_V_BF2 + 1, 0:D]
        g2 = vec[_V_G2:_V_G2 + 1, 0:D]
        b2 = vec[_V_B2:_V_B2 + 1, 0:D]

        # ---- multi-head self attention (post-norm), packed QKV projection ----
        qkv = jnp.dot(x, wqkv_ref[l], preferred_element_type=jnp.float32) + bqkv

        head_outs = []
        for h in range(H):                                         # static head loop
            q = qkv[:, h * hd:(h + 1) * hd] * scaling
            k = qkv[:, D + h * hd:D + (h + 1) * hd]
            v = qkv[:, 2 * D + h * hd:2 * D + (h + 1) * hd]
            q3 = q.reshape(B, S, hd)
            k3 = k.reshape(B, S, hd)
            v3 = v.reshape(B, S, hd)
            s = jnp.einsum('bqd,bkd->bqk', q3, k3,
                           preferred_element_type=jnp.float32)     # [B, S, S]
            s = s + maskb                                          # mask pad keys
            s = s - jnp.max(s, axis=-1, keepdims=True)             # stable softmax
            p = jnp.exp(s)
            p = p * pl.reciprocal(jnp.sum(p, axis=-1, keepdims=True), approx=True)
            oh = jnp.einsum('bqk,bkd->bqd', p, v3,
                            preferred_element_type=jnp.float32)    # [B, S, hd]
            head_outs.append(oh.reshape(N, hd))
        attn = jnp.concatenate(head_outs, axis=-1)                 # [N, D]
        attn = jnp.dot(attn, wo_ref[l], preferred_element_type=jnp.float32) + bo
        x = _ln_affine(x + attn, g1, b1)

        # ---- feed-forward ----
        h1 = _gelu(jnp.dot(x, w1_ref[l], preferred_element_type=jnp.float32) + bf1)
        h2 = jnp.dot(h1, w2_ref[l], preferred_element_type=jnp.float32) + bf2
        x = _ln_affine(x + h2, g2, b2)

    # cls = src[0, :, :] -> first token of each sequence (rows are batch-major)
    cls = jnp.concatenate([x[b * S:b * S + 1, :] for b in range(B)], axis=0)  # [B, D]

    # projection + parameter-free layer_norm (eps=1e-12); dropout is identity (eval)
    y = jnp.dot(cls, wproj_ref[...], preferred_element_type=jnp.float32) + bproj_ref[...]
    u = jnp.mean(y, axis=-1, keepdims=True)
    var = jnp.mean((y - u) ** 2, axis=-1, keepdims=True)
    o_ref[...] = ((y - u) * jax.lax.rsqrt(var + 1e-12)).astype(o_ref.dtype)


# ------------------------------ params / glue ---------------------------------
def sinusoidal_pos_embedding(num_pos, dim):
    half = dim // 2
    step = math.log(10000.0) / (half - 1)
    freqs = jnp.exp(jnp.arange(half, dtype=jnp.float32) * -step)
    ang = jnp.arange(num_pos, dtype=jnp.float32)[:, None] * freqs[None, :]
    emb = jnp.concatenate([jnp.sin(ang), jnp.cos(ang)], axis=1)
    if dim % 2 == 1:
        emb = jnp.concatenate([emb, jnp.zeros((num_pos, 1), jnp.float32)], axis=1)
    return emb


def init_params(key):
    """Deterministic init matching the module's reset_parameters conventions,
    stored directly in the packed layouts the fused kernel consumes."""
    D, F = EMBED_DIM, FF_DIM
    vec_w = 3 * D
    keys = iter(jax.random.split(key, 2 + 4 * LAYERS))

    emb = (D ** -0.5) * jax.random.normal(next(keys), (VOCAB, D), jnp.float32)
    emb = emb.at[PAD_IDX].set(0.0)

    def pad(v):
        return jnp.pad(v, (0, vec_w - v.shape[0]))

    wqkv, wo, w1, w2, vecs = [], [], [], [], []
    for _ in range(LAYERS):
        # attention in/out projections, std=0.02; QKV packed [D, 3D] = [q|k|v],
        # heads ordered h0,h1 within each D-wide block (pre-transposed for x @ W).
        wqkv.append(0.02 * jax.random.normal(next(keys), (D, 3 * D), jnp.float32))
        wo.append(0.02 * jax.random.normal(next(keys), (D, D), jnp.float32))
        w1.append(0.02 * jax.random.normal(next(keys), (D, F), jnp.float32))
        w2.append(0.02 * jax.random.normal(next(keys), (F, D), jnp.float32))
        vecs.append(jnp.stack([
            pad(jnp.zeros((3 * D,), jnp.float32)),   # bqkv
            pad(jnp.zeros((D,), jnp.float32)),       # bo
            pad(jnp.ones((D,), jnp.float32)),        # LN1 gamma
            pad(jnp.zeros((D,), jnp.float32)),       # LN1 beta
            pad(jnp.zeros((F,), jnp.float32)),       # FFN bias 1
            pad(jnp.zeros((D,), jnp.float32)),       # FFN bias 2
            pad(jnp.ones((D,), jnp.float32)),        # LN2 gamma
            pad(jnp.zeros((D,), jnp.float32)),       # LN2 beta
        ], axis=0))                                  # [8, 3D]

    w_proj = 0.02 * jax.random.normal(next(keys), (D, OUTPUT_DIM), jnp.float32)
    b_proj = jnp.zeros((1, OUTPUT_DIM), jnp.float32)
    return dict(emb=emb, wqkv=jnp.stack(wqkv), wo=jnp.stack(wo),
                w1=jnp.stack(w1), w2=jnp.stack(w2), vecs=jnp.stack(vecs),
                w_proj=w_proj, b_proj=b_proj)


def proj_encoder_forward(params, input_ids, batch_first=False):
    """Equivalent of ProjEncoder.forward (eval mode; returns `ret`)."""
    if batch_first:
        input_ids = input_ids.T
    S, B = input_ids.shape                                  # PyTorch default [S, B]

    ids_bs = input_ids.T.astype(jnp.int32)                  # [B, S] batch-major
    # TODO(synk): embedding gather is data-dependent; kept in plain JAX glue.
    tok = jnp.take(params["emb"], ids_bs.reshape(-1), axis=0)   # [B*S, D]
    pos = sinusoidal_pos_embedding(S, EMBED_DIM)                # [S, D]

    return pl.pallas_call(
        proj_encoder_kernel,
        out_shape=jax.ShapeDtypeStruct((B, OUTPUT_DIM), jnp.float32),
    )(ids_bs, tok.astype(jnp.float32), pos,
      params["wqkv"], params["wo"], params["w1"], params["w2"], params["vecs"],
      params["w_proj"], params["b_proj"])


# ---------------------- pure-JAX reference (same math) -------------------------
def proj_encoder_reference(params, input_ids):
    S, B = input_ids.shape
    D, F, hd = EMBED_DIM, FF_DIM, HEAD_DIM
    ids_bs = input_ids.T
    tok = jnp.take(params["emb"], ids_bs.reshape(-1), axis=0)
    x = math.sqrt(D) * tok + jnp.tile(sinusoidal_pos_embedding(S, D), (B, 1))
    maskb = jnp.where(ids_bs == PAD_IDX, -1e30, 0.0)[:, None, :]
    for l in range(LAYERS):
        vec = params["vecs"][l]
        bqkv = vec[_V_BQKV:_V_BQKV + 1, :]
        bo, g1, b1 = vec[_V_BO, :D], vec[_V_G1, :D], vec[_V_B1, :D]
        bf1, bf2 = vec[_V_BF1, :F], vec[_V_BF2, :D]
        g2, b2 = vec[_V_G2, :D], vec[_V_B2, :D]
        qkv = x @ params["wqkv"][l] + bqkv
        heads = []
        for h in range(NUM_HEADS):
            q = qkv[:, h * hd:(h + 1) * hd] * (hd ** -0.5)
            k = qkv[:, D + h * hd:D + (h + 1) * hd]
            v = qkv[:, 2 * D + h * hd:2 * D + (h + 1) * hd]
            s = jnp.einsum('bqd,bkd->bqk', q.reshape(B, S, hd), k.reshape(B, S, hd)) + maskb
            p = jax.nn.softmax(s, axis=-1)
            heads.append(jnp.einsum('bqk,bkd->bqd', p, v.reshape(B, S, hd)).reshape(B * S, hd))
        attn = jnp.concatenate(heads, axis=-1) @ params["wo"][l] + bo
        x = _ln_affine(x + attn, g1, b1)
        h1 = _gelu(x @ params["w1"][l] + bf1)
        x = _ln_affine(x + h1 @ params["w2"][l] + bf2, g2, b2)
    cls = x.reshape(B, S, D)[:, 0, :]
    y = cls @ params["w_proj"] + params["b_proj"]
    u = y.mean(-1, keepdims=True)
    var = ((y - u) ** 2).mean(-1, keepdims=True)
    return (y - u) * jax.lax.rsqrt(var + 1e-12)


# ----------------------------------- main -------------------------------------
if __name__ == "__main__":
    root = jax.random.PRNGKey(0)
    pkey, dkey = jax.random.split(root)
    params = init_params(pkey)

    # input_ids in the PyTorch default layout: [seq_len, batch] (batch_first=False)
    input_ids = jax.random.randint(dkey, (SEQ, BATCH), 1, VOCAB, dtype=jnp.int32)
    input_ids = input_ids.at[SEQ - 2:, 1].set(PAD_IDX)       # pad tail of 2nd sequence

    fwd = jax.jit(proj_encoder_forward)
    out = jax.block_until_ready(fwd(params, input_ids))

    assert out.shape == (BATCH, OUTPUT_DIM) and out.dtype == jnp.float32
    assert bool(jnp.all(jnp.isfinite(out)))

    ref = proj_encoder_reference(params, input_ids)
    max_diff = float(jnp.max(jnp.abs(out - ref)))
    # loose tolerance: only approx-reciprocal + float re-association differ
    assert max_diff < 1e-1, f"kernel/reference mismatch: max |diff| = {max_diff}"

    print("KERNEL_OK")
</pallas_src>

<mosaic_0001>
module attributes {stable_mosaic.version = 11 : i64} {
  func.func @proj_encoder_kernel(%arg0: memref<2x8xi32, #tpu.memory_space<vmem>>, %arg1: memref<16x32xf32, #tpu.memory_space<vmem>>, %arg2: memref<8x32xf32, #tpu.memory_space<vmem>>, %arg3: memref<2x32x96xf32, #tpu.memory_space<vmem>>, %arg4: memref<2x32x32xf32, #tpu.memory_space<vmem>>, %arg5: memref<2x32x64xf32, #tpu.memory_space<vmem>>, %arg6: memref<2x64x32xf32, #tpu.memory_space<vmem>>, %arg7: memref<2x8x96xf32, #tpu.memory_space<vmem>>, %arg8: memref<32x16xf32, #tpu.memory_space<vmem>>, %arg9: memref<1x16xf32, #tpu.memory_space<vmem>>, %arg10: memref<2x16xf32, #tpu.memory_space<vmem>>) attributes {dimension_semantics = [], scalar_prefetch = 0 : i64, scratch_operands = 0 : i64, tpu.core_type = #tpu.core_type<tc>} {
    %c0 = arith.constant 0 : index
    %c0_0 = arith.constant 0 : index
    %0 = vector.load %arg0[%c0, %c0_0] : memref<2x8xi32, #tpu.memory_space<vmem>>, vector<2x8xi32>
    %c0_i32 = arith.constant 0 : i32
    %1 = vector.broadcast %c0_i32 : i32 to vector<2x8xi32>
    %2 = arith.cmpi eq, %0, %1 : vector<2x8xi32>
    %cst = arith.constant -1.000000e+30 : f32
    %cst_1 = arith.constant 0.000000e+00 : f32
    %3 = vector.broadcast %cst : f32 to vector<2x8xf32>
    %4 = vector.broadcast %cst_1 : f32 to vector<2x8xf32>
    %5 = arith.select %2, %3, %4 : vector<2x8xi1>, vector<2x8xf32>
    %6 = vector.shape_cast %5 : vector<2x8xf32> to vector<2x1x8xf32>
    %c0_2 = arith.constant 0 : index
    %c0_3 = arith.constant 0 : index
    %7 = vector.load %arg2[%c0_2, %c0_3] : memref<8x32xf32, #tpu.memory_space<vmem>>, vector<8x32xf32>
    %8 = tpu.concatenate %7, %7 in 0 : vector<8x32xf32>, vector<8x32xf32> -> vector<16x32xf32>
    %c0_4 = arith.constant 0 : index
    %c0_5 = arith.constant 0 : index
    %9 = vector.load %arg1[%c0_4, %c0_5] : memref<16x32xf32, #tpu.memory_space<vmem>>, vector<16x32xf32>
    %cst_6 = arith.constant 5.65685415 : f32
    %10 = vector.broadcast %cst_6 : f32 to vector<16x32xf32>
    %11 = arith.mulf %10, %9 : vector<16x32xf32>
    %12 = arith.addf %11, %8 : vector<16x32xf32>
    %c0_7 = arith.constant 0 : index
    %c0_8 = arith.constant 0 : index
    %c0_9 = arith.constant 0 : index
    %13 = vector.load %arg7[%c0_7, %c0_8, %c0_9] : memref<2x8x96xf32, #tpu.memory_space<vmem>>, vector<1x8x96xf32>
    %14 = vector.shape_cast %13 : vector<1x8x96xf32> to vector<8x96xf32>
    %15 = vector.extract_strided_slice %14 {offsets = [0, 0], sizes = [1, 96], strides = [1, 1]} : vector<8x96xf32> to vector<1x96xf32>
    %16 = vector.extract_strided_slice %14 {offsets = [1, 0], sizes = [1, 32], strides = [1, 1]} : vector<8x96xf32> to vector<1x32xf32>
    %17 = vector.extract_strided_slice %14 {offsets = [2, 0], sizes = [1, 32], strides = [1, 1]} : vector<8x96xf32> to vector<1x32xf32>
    %18 = vector.extract_strided_slice %14 {offsets = [3, 0], sizes = [1, 32], strides = [1, 1]} : vector<8x96xf32> to vector<1x32xf32>
    %19 = vector.extract_strided_slice %14 {offsets = [4, 0], sizes = [1, 64], strides = [1, 1]} : vector<8x96xf32> to vector<1x64xf32>
    %20 = vector.extract_strided_slice %14 {offsets = [5, 0], sizes = [1, 32], strides = [1, 1]} : vector<8x96xf32> to vector<1x32xf32>
    %21 = vector.extract_strided_slice %14 {offsets = [6, 0], sizes = [1, 32], strides = [1, 1]} : vector<8x96xf32> to vector<1x32xf32>
    %22 = vector.extract_strided_slice %14 {offsets = [7, 0], sizes = [1, 32], strides = [1, 1]} : vector<8x96xf32> to vector<1x32xf32>
    %c0_10 = arith.constant 0 : index
    %c0_11 = arith.constant 0 : index
    %c0_12 = arith.constant 0 : index
    %23 = vector.load %arg3[%c0_10, %c0_11, %c0_12] : memref<2x32x96xf32, #tpu.memory_space<vmem>>, vector<1x32x96xf32>
    %24 = vector.shape_cast %23 : vector<1x32x96xf32> to vector<32x96xf32>
    %cst_13 = arith.constant dense<0.000000e+00> : vector<16x96xf32>
    %25 = tpu.matmul %12, %24, %cst_13 {dimension_numbers = #tpu.dot_dimension_numbers<[1], [0], [0], [1], [0, 0, 1, 1], [], []>} : vector<16x32xf32>, vector<32x96xf32>, vector<16x96xf32> -> vector<16x96xf32>
    %26 = vector.broadcast %15 : vector<1x96xf32> to vector<16x96xf32>
    %27 = arith.addf %25, %26 : vector<16x96xf32>
    %28 = vector.extract_strided_slice %27 {offsets = [0, 0], sizes = [16, 16], strides = [1, 1]} : vector<16x96xf32> to vector<16x16xf32>
    %cst_14 = arith.constant 2.500000e-01 : f32
    %29 = vector.broadcast %cst_14 : f32 to vector<16x16xf32>
    %30 = arith.mulf %28, %29 : vector<16x16xf32>
    %31 = vector.extract_strided_slice %27 {offsets = [0, 32], sizes = [16, 16], strides = [1, 1]} : vector<16x96xf32> to vector<16x16xf32>
    %32 = vector.extract_strided_slice %27 {offsets = [0, 64], sizes = [16, 16], strides = [1, 1]} : vector<16x96xf32> to vector<16x16xf32>
    %33 = vector.shape_cast %30 : vector<16x16xf32> to vector<2x8x16xf32>
    %34 = vector.shape_cast %31 : vector<16x16xf32> to vector<2x8x16xf32>
    %35 = vector.shape_cast %32 : vector<16x16xf32> to vector<2x8x16xf32>
    "tpu.trace_start"() <{level = 10 : i32, message = "bqd,bkd->bqk"}> : () -> ()
    %cst_15 = arith.constant dense<0.000000e+00> : vector<2x8x8xf32>
    %36 = tpu.matmul %33, %34, %cst_15 {dimension_numbers = #tpu.dot_dimension_numbers<[2], [2], [1], [1], [0, 0, 0, 1, 1, 1], [0], [0]>} : vector<2x8x16xf32>, vector<2x8x16xf32>, vector<2x8x8xf32> -> vector<2x8x8xf32>
    "tpu.trace_stop"() : () -> ()
    %37 = vector.broadcast %6 : vector<2x1x8xf32> to vector<2x8x8xf32>
    %38 = arith.addf %36, %37 : vector<2x8x8xf32>
    %cst_16 = arith.constant dense<0xFF800000> : vector<2x8xf32>
    %39 = vector.multi_reduction <maximumf>, %38, %cst_16 [2] : vector<2x8x8xf32> to vector<2x8xf32>
    %40 = vector.shape_cast %39 : vector<2x8xf32> to vector<2x8x1xf32>
    %41 = vector.broadcast %40 : vector<2x8x1xf32> to vector<2x8x8xf32>
    %42 = arith.subf %38, %41 : vector<2x8x8xf32>
    %43 = math.exp %42 : vector<2x8x8xf32>
    %cst_17 = arith.constant dense<0.000000e+00> : vector<2x8xf32>
    %44 = vector.multi_reduction <add>, %43, %cst_17 [2] : vector<2x8x8xf32> to vector<2x8xf32>
    %45 = vector.shape_cast %44 : vector<2x8xf32> to vector<2x8x1xf32>
    %46 = tpu.reciprocal %45 {approx = true} : vector<2x8x1xf32> -> vector<2x8x1xf32>
    %47 = vector.broadcast %46 : vector<2x8x1xf32> to vector<2x8x8xf32>
    %48 = arith.mulf %43, %47 : vector<2x8x8xf32>
    "tpu.trace_start"() <{level = 10 : i32, message = "bqk,bkd->bqd"}> : () -> ()
    %cst_18 = arith.constant dense<0.000000e+00> : vector<2x8x16xf32>
    %49 = tpu.matmul %48, %35, %cst_18 {dimension_numbers = #tpu.dot_dimension_numbers<[2], [1], [1], [2], [0, 0, 0, 1, 1, 2], [0], [0]>} : vector<2x8x8xf32>, vector<2x8x16xf32>, vector<2x8x16xf32> -> vector<2x8x16xf32>
    "tpu.trace_stop"() : () -> ()
    %50 = vector.shape_cast %49 : vector<2x8x16xf32> to vector<16x16xf32>
    %51 = vector.extract_strided_slice %27 {offsets = [0, 16], sizes = [16, 16], strides = [1, 1]} : vector<16x96xf32> to vector<16x16xf32>
    %cst_19 = arith.constant 2.500000e-01 : f32
    %52 = vector.broadcast %cst_19 : f32 to vector<16x16xf32>
    %53 = arith.mulf %51, %52 : vector<16x16xf32>
    %54 = vector.extract_strided_slice %27 {offsets = [0, 48], sizes = [16, 16], strides = [1, 1]} : vector<16x96xf32> to vector<16x16xf32>
    %55 = vector.extract_strided_slice %27 {offsets = [0, 80], sizes = [16, 16], strides = [1, 1]} : vector<16x96xf32> to vector<16x16xf32>
    %56 = vector.shape_cast %53 : vector<16x16xf32> to vector<2x8x16xf32>
    %57 = vector.shape_cast %54 : vector<16x16xf32> to vector<2x8x16xf32>
    %58 = vector.shape_cast %55 : vector<16x16xf32> to vector<2x8x16xf32>
    "tpu.trace_start"() <{level = 10 : i32, message = "bqd,bkd->bqk"}> : () -> ()
    %cst_20 = arith.constant dense<0.000000e+00> : vector<2x8x8xf32>
    %59 = tpu.matmul %56, %57, %cst_20 {dimension_numbers = #tpu.dot_dimension_numbers<[2], [2], [1], [1], [0, 0, 0, 1, 1, 1], [0], [0]>} : vector<2x8x16xf32>, vector<2x8x16xf32>, vector<2x8x8xf32> -> vector<2x8x8xf32>
    "tpu.trace_stop"() : () -> ()
    %60 = vector.broadcast %6 : vector<2x1x8xf32> to vector<2x8x8xf32>
    %61 = arith.addf %59, %60 : vector<2x8x8xf32>
    %cst_21 = arith.constant dense<0xFF800000> : vector<2x8xf32>
    %62 = vector.multi_reduction <maximumf>, %61, %cst_21 [2] : vector<2x8x8xf32> to vector<2x8xf32>
    %63 = vector.shape_cast %62 : vector<2x8xf32> to vector<2x8x1xf32>
    %64 = vector.broadcast %63 : vector<2x8x1xf32> to vector<2x8x8xf32>
    %65 = arith.subf %61, %64 : vector<2x8x8xf32>
    %66 = math.exp %65 : vector<2x8x8xf32>
    %cst_22 = arith.constant dense<0.000000e+00> : vector<2x8xf32>
    %67 = vector.multi_reduction <add>, %66, %cst_22 [2] : vector<2x8x8xf32> to vector<2x8xf32>
    %68 = vector.shape_cast %67 : vector<2x8xf32> to vector<2x8x1xf32>
    %69 = tpu.reciprocal %68 {approx = true} : vector<2x8x1xf32> -> vector<2x8x1xf32>
    %70 = vector.broadcast %69 : vector<2x8x1xf32> to vector<2x8x8xf32>
    %71 = arith.mulf %66, %70 : vector<2x8x8xf32>
    "tpu.trace_start"() <{level = 10 : i32, message = "bqk,bkd->bqd"}> : () -> ()
    %cst_23 = arith.constant dense<0.000000e+00> : vector<2x8x16xf32>
    %72 = tpu.matmul %71, %58, %cst_23 {dimension_numbers = #tpu.dot_dimension_numbers<[2], [1], [1], [2], [0, 0, 0, 1, 1, 2], [0], [0]>} : vector<2x8x8xf32>, vector<2x8x16xf32>, vector<2x8x16xf32> -> vector<2x8x16xf32>
    "tpu.trace_stop"() : () -> ()
    %73 = vector.shape_cast %72 : vector<2x8x16xf32> to vector<16x16xf32>
    %74 = tpu.concatenate %50, %73 in 1 : vector<16x16xf32>, vector<16x16xf32> -> vector<16x32xf32>
    %c0_24 = arith.constant 0 : index
    %c0_25 = arith.constant 0 : index
    %c0_26 = arith.constant 0 : index
    %75 = vector.load %arg4[%c0_24, %c0_25, %c0_26] : memref<2x32x32xf32, #tpu.memory_space<vmem>>, vector<1x32x32xf32>
    %76 = vector.shape_cast %75 : vector<1x32x32xf32> to vector<32x32xf32>
    %cst_27 = arith.constant dense<0.000000e+00> : vector<16x32xf32>
    %77 = tpu.matmul %74, %76, %cst_27 {dimension_numbers = #tpu.dot_dimension_numbers<[1], [0], [0], [1], [0, 0, 1, 1], [], []>} : vector<16x32xf32>, vector<32x32xf32>, vector<16x32xf32> -> vector<16x32xf32>
    %78 = vector.broadcast %16 : vector<1x32xf32> to vector<16x32xf32>
    %79 = arith.addf %77, %78 : vector<16x32xf32>
    %80 = arith.addf %12, %79 : vector<16x32xf32>
    %cst_28 = arith.constant dense<0.000000e+00> : vector<16xf32>
    %81 = vector.multi_reduction <add>, %80, %cst_28 [1] : vector<16x32xf32> to vector<16xf32>
    %82 = vector.shape_cast %81 : vector<16xf32> to vector<16x1xf32>
    %cst_29 = arith.constant 3.200000e+01 : f32
    %83 = vector.broadcast %cst_29 : f32 to vector<16x1xf32>
    %84 = arith.divf %82, %83 : vector<16x1xf32>
    %85 = vector.broadcast %84 : vector<16x1xf32> to vector<16x32xf32>
    %86 = arith.subf %80, %85 : vector<16x32xf32>
    %87 = arith.mulf %86, %86 : vector<16x32xf32>
    %cst_30 = arith.constant dense<0.000000e+00> : vector<16xf32>
    %88 = vector.multi_reduction <add>, %87, %cst_30 [1] : vector<16x32xf32> to vector<16xf32>
    %89 = vector.shape_cast %88 : vector<16xf32> to vector<16x1xf32>
    %cst_31 = arith.constant 3.200000e+01 : f32
    %90 = vector.broadcast %cst_31 : f32 to vector<16x1xf32>
    %91 = arith.divf %89, %90 : vector<16x1xf32>
    %92 = vector.broadcast %84 : vector<16x1xf32> to vector<16x32xf32>
    %93 = arith.subf %80, %92 : vector<16x32xf32>
    %cst_32 = arith.constant 9.99999974E-6 : f32
    %94 = vector.broadcast %cst_32 : f32 to vector<16x1xf32>
    %95 = arith.addf %91, %94 : vector<16x1xf32>
    %96 = math.rsqrt %95 : vector<16x1xf32>
    %97 = vector.broadcast %96 : vector<16x1xf32> to vector<16x32xf32>
    %98 = arith.mulf %93, %97 : vector<16x32xf32>
    %99 = vector.broadcast %17 : vector<1x32xf32> to vector<16x32xf32>
    %100 = arith.mulf %98, %99 : vector<16x32xf32>
    %101 = vector.broadcast %18 : vector<1x32xf32> to vector<16x32xf32>
    %102 = arith.addf %100, %101 : vector<16x32xf32>
    %c0_33 = arith.constant 0 : index
    %c0_34 = arith.constant 0 : index
    %c0_35 = arith.constant 0 : index
    %103 = vector.load %arg5[%c0_33, %c0_34, %c0_35] : memref<2x32x64xf32, #tpu.memory_space<vmem>>, vector<1x32x64xf32>
    %104 = vector.shape_cast %103 : vector<1x32x64xf32> to vector<32x64xf32>
    %cst_36 = arith.constant dense<0.000000e+00> : vector<16x64xf32>
    %105 = tpu.matmul %102, %104, %cst_36 {dimension_numbers = #tpu.dot_dimension_numbers<[1], [0], [0], [1], [0, 0, 1, 1], [], []>} : vector<16x32xf32>, vector<32x64xf32>, vector<16x64xf32> -> vector<16x64xf32>
    %106 = vector.broadcast %19 : vector<1x64xf32> to vector<16x64xf32>
    %107 = arith.addf %105, %106 : vector<16x64xf32>
    %cst_37 = arith.constant 5.000000e-01 : f32
    %108 = vector.broadcast %cst_37 : f32 to vector<16x64xf32>
    %109 = arith.mulf %108, %107 : vector<16x64xf32>
    %cst_38 = arith.constant 4.471500e-02 : f32
    %110 = vector.broadcast %cst_38 : f32 to vector<16x64xf32>
    %111 = arith.mulf %110, %107 : vector<16x64xf32>
    %112 = arith.mulf %111, %107 : vector<16x64xf32>
    %113 = arith.mulf %112, %107 : vector<16x64xf32>
    %114 = arith.addf %107, %113 : vector<16x64xf32>
    %cst_39 = arith.constant 0.797884583 : f32
    %115 = vector.broadcast %cst_39 : f32 to vector<16x64xf32>
    %116 = arith.mulf %115, %114 : vector<16x64xf32>
    %117 = math.tanh %116 : vector<16x64xf32>
    %cst_40 = arith.constant 1.000000e+00 : f32
    %118 = vector.broadcast %cst_40 : f32 to vector<16x64xf32>
    %119 = arith.addf %118, %117 : vector<16x64xf32>
    %120 = arith.mulf %109, %119 : vector<16x64xf32>
    %c0_41 = arith.constant 0 : index
    %c0_42 = arith.constant 0 : index
    %c0_43 = arith.constant 0 : index
    %121 = vector.load %arg6[%c0_41, %c0_42, %c0_43] : memref<2x64x32xf32, #tpu.memory_space<vmem>>, vector<1x64x32xf32>
    %122 = vector.shape_cast %121 : vector<1x64x32xf32> to vector<64x32xf32>
    %cst_44 = arith.constant dense<0.000000e+00> : vector<16x32xf32>
    %123 = tpu.matmul %120, %122, %cst_44 {dimension_numbers = #tpu.dot_dimension_numbers<[1], [0], [0], [1], [0, 0, 1, 1], [], []>} : vector<16x64xf32>, vector<64x32xf32>, vector<16x32xf32> -> vector<16x32xf32>
    %124 = vector.broadcast %20 : vector<1x32xf32> to vector<16x32xf32>
    %125 = arith.addf %123, %124 : vector<16x32xf32>
    %126 = arith.addf %102, %125 : vector<16x32xf32>
    %cst_45 = arith.constant dense<0.000000e+00> : vector<16xf32>
    %127 = vector.multi_reduction <add>, %126, %cst_45 [1] : vector<16x32xf32> to vector<16xf32>
    %128 = vector.shape_cast %127 : vector<16xf32> to vector<16x1xf32>
    %cst_46 = arith.constant 3.200000e+01 : f32
    %129 = vector.broadcast %cst_46 : f32 to vector<16x1xf32>
    %130 = arith.divf %128, %129 : vector<16x1xf32>
    %131 = vector.broadcast %130 : vector<16x1xf32> to vector<16x32xf32>
    %132 = arith.subf %126, %131 : vector<16x32xf32>
    %133 = arith.mulf %132, %132 : vector<16x32xf32>
    %cst_47 = arith.constant dense<0.000000e+00> : vector<16xf32>
    %134 = vector.multi_reduction <add>, %133, %cst_47 [1] : vector<16x32xf32> to vector<16xf32>
    %135 = vector.shape_cast %134 : vector<16xf32> to vector<16x1xf32>
    %cst_48 = arith.constant 3.200000e+01 : f32
    %136 = vector.broadcast %cst_48 : f32 to vector<16x1xf32>
    %137 = arith.divf %135, %136 : vector<16x1xf32>
    %138 = vector.broadcast %130 : vector<16x1xf32> to vector<16x32xf32>
    %139 = arith.subf %126, %138 : vector<16x32xf32>
    %cst_49 = arith.constant 9.99999974E-6 : f32
    %140 = vector.broadcast %cst_49 : f32 to vector<16x1xf32>
    %141 = arith.addf %137, %140 : vector<16x1xf32>
    %142 = math.rsqrt %141 : vector<16x1xf32>
    %143 = vector.broadcast %142 : vector<16x1xf32> to vector<16x32xf32>
    %144 = arith.mulf %139, %143 : vector<16x32xf32>
    %145 = vector.broadcast %21 : vector<1x32xf32> to vector<16x32xf32>
    %146 = arith.mulf %144, %145 : vector<16x32xf32>
    %147 = vector.broadcast %22 : vector<1x32xf32> to vector<16x32xf32>
    %148 = arith.addf %146, %147 : vector<16x32xf32>
    %c1 = arith.constant 1 : index
    %c0_50 = arith.constant 0 : index
    %c0_51 = arith.constant 0 : index
    %149 = vector.load %arg7[%c1, %c0_50, %c0_51] : memref<2x8x96xf32, #tpu.memory_space<vmem>>, vector<1x8x96xf32>
    %150 = vector.shape_cast %149 : vector<1x8x96xf32> to vector<8x96xf32>
    %151 = vector.extract_strided_slice %150 {offsets = [0, 0], sizes = [1, 96], strides = [1, 1]} : vector<8x96xf32> to vector<1x96xf32>
    %152 = vector.extract_strided_slice %150 {offsets = [1, 0], sizes = [1, 32], strides = [1, 1]} : vector<8x96xf32> to vector<1x32xf32>
    %153 = vector.extract_strided_slice %150 {offsets = [2, 0], sizes = [1, 32], strides = [1, 1]} : vector<8x96xf32> to vector<1x32xf32>
    %154 = vector.extract_strided_slice %150 {offsets = [3, 0], sizes = [1, 32], strides = [1, 1]} : vector<8x96xf32> to vector<1x32xf32>
    %155 = vector.extract_strided_slice %150 {offsets = [4, 0], sizes = [1, 64], strides = [1, 1]} : vector<8x96xf32> to vector<1x64xf32>
    %156 = vector.extract_strided_slice %150 {offsets = [5, 0], sizes = [1, 32], strides = [1, 1]} : vector<8x96xf32> to vector<1x32xf32>
    %157 = vector.extract_strided_slice %150 {offsets = [6, 0], sizes = [1, 32], strides = [1, 1]} : vector<8x96xf32> to vector<1x32xf32>
    %158 = vector.extract_strided_slice %150 {offsets = [7, 0], sizes = [1, 32], strides = [1, 1]} : vector<8x96xf32> to vector<1x32xf32>
    %c1_52 = arith.constant 1 : index
    %c0_53 = arith.constant 0 : index
    %c0_54 = arith.constant 0 : index
    %159 = vector.load %arg3[%c1_52, %c0_53, %c0_54] : memref<2x32x96xf32, #tpu.memory_space<vmem>>, vector<1x32x96xf32>
    %160 = vector.shape_cast %159 : vector<1x32x96xf32> to vector<32x96xf32>
    %cst_55 = arith.constant dense<0.000000e+00> : vector<16x96xf32>
    %161 = tpu.matmul %148, %160, %cst_55 {dimension_numbers = #tpu.dot_dimension_numbers<[1], [0], [0], [1], [0, 0, 1, 1], [], []>} : vector<16x32xf32>, vector<32x96xf32>, vector<16x96xf32> -> vector<16x96xf32>
    %162 = vector.broadcast %151 : vector<1x96xf32> to vector<16x96xf32>
    %163 = arith.addf %161, %162 : vector<16x96xf32>
    %164 = vector.extract_strided_slice %163 {offsets = [0, 0], sizes = [16, 16], strides = [1, 1]} : vector<16x96xf32> to vector<16x16xf32>
    %cst_56 = arith.constant 2.500000e-01 : f32
    %165 = vector.broadcast %cst_56 : f32 to vector<16x16xf32>
    %166 = arith.mulf %164, %165 : vector<16x16xf32>
    %167 = vector.extract_strided_slice %163 {offsets = [0, 32], sizes = [16, 16], strides = [1, 1]} : vector<16x96xf32> to vector<16x16xf32>
    %168 = vector.extract_strided_slice %163 {offsets = [0, 64], sizes = [16, 16], strides = [1, 1]} : vector<16x96xf32> to vector<16x16xf32>
    %169 = vector.shape_cast %166 : vector<16x16xf32> to vector<2x8x16xf32>
    %170 = vector.shape_cast %167 : vector<16x16xf32> to vector<2x8x16xf32>
    %171 = vector.shape_cast %168 : vector<16x16xf32> to vector<2x8x16xf32>
    "tpu.trace_start"() <{level = 10 : i32, message = "bqd,bkd->bqk"}> : () -> ()
    %cst_57 = arith.constant dense<0.000000e+00> : vector<2x8x8xf32>
    %172 = tpu.matmul %169, %170, %cst_57 {dimension_numbers = #tpu.dot_dimension_numbers<[2], [2], [1], [1], [0, 0, 0, 1, 1, 1], [0], [0]>} : vector<2x8x16xf32>, vector<2x8x16xf32>, vector<2x8x8xf32> -> vector<2x8x8xf32>
    "tpu.trace_stop"() : () -> ()
    %173 = vector.broadcast %6 : vector<2x1x8xf32> to vector<2x8x8xf32>
    %174 = arith.addf %172, %173 : vector<2x8x8xf32>
    %cst_58 = arith.constant dense<0xFF800000> : vector<2x8xf32>
    %175 = vector.multi_reduction <maximumf>, %174, %cst_58 [2] : vector<2x8x8xf32> to vector<2x8xf32>
    %176 = vector.shape_cast %175 : vector<2x8xf32> to vector<2x8x1xf32>
    %177 = vector.broadcast %176 : vector<2x8x1xf32> to vector<2x8x8xf32>
    %178 = arith.subf %174, %177 : vector<2x8x8xf32>
    %179 = math.exp %178 : vector<2x8x8xf32>
    %cst_59 = arith.constant dense<0.000000e+00> : vector<2x8xf32>
    %180 = vector.multi_reduction <add>, %179, %cst_59 [2] : vector<2x8x8xf32> to vector<2x8xf32>
    %181 = vector.shape_cast %180 : vector<2x8xf32> to vector<2x8x1xf32>
    %182 = tpu.reciprocal %181 {approx = true} : vector<2x8x1xf32> -> vector<2x8x1xf32>
    %183 = vector.broadcast %182 : vector<2x8x1xf32> to vector<2x8x8xf32>
    %184 = arith.mulf %179, %183 : vector<2x8x8xf32>
    "tpu.trace_start"() <{level = 10 : i32, message = "bqk,bkd->bqd"}> : () -> ()
    %cst_60 = arith.constant dense<0.000000e+00> : vector<2x8x16xf32>
    %185 = tpu.matmul %184, %171, %cst_60 {dimension_numbers = #tpu.dot_dimension_numbers<[2], [1], [1], [2], [0, 0, 0, 1, 1, 2], [0], [0]>} : vector<2x8x8xf32>, vector<2x8x16xf32>, vector<2x8x16xf32> -> vector<2x8x16xf32>
    "tpu.trace_stop"() : () -> ()
    %186 = vector.shape_cast %185 : vector<2x8x16xf32> to vector<16x16xf32>
    %187 = vector.extract_strided_slice %163 {offsets = [0, 16], sizes = [16, 16], strides = [1, 1]} : vector<16x96xf32> to vector<16x16xf32>
    %cst_61 = arith.constant 2.500000e-01 : f32
    %188 = vector.broadcast %cst_61 : f32 to vector<16x16xf32>
    %189 = arith.mulf %187, %188 : vector<16x16xf32>
    %190 = vector.extract_strided_slice %163 {offsets = [0, 48], sizes = [16, 16], strides = [1, 1]} : vector<16x96xf32> to vector<16x16xf32>
    %191 = vector.extract_strided_slice %163 {offsets = [0, 80], sizes = [16, 16], strides = [1, 1]} : vector<16x96xf32> to vector<16x16xf32>
    %192 = vector.shape_cast %189 : vector<16x16xf32> to vector<2x8x16xf32>
    %193 = vector.shape_cast %190 : vector<16x16xf32> to vector<2x8x16xf32>
    %194 = vector.shape_cast %191 : vector<16x16xf32> to vector<2x8x16xf32>
    "tpu.trace_start"() <{level = 10 : i32, message = "bqd,bkd->bqk"}> : () -> ()
    %cst_62 = arith.constant dense<0.000000e+00> : vector<2x8x8xf32>
    %195 = tpu.matmul %192, %193, %cst_62 {dimension_numbers = #tpu.dot_dimension_numbers<[2], [2], [1], [1], [0, 0, 0, 1, 1, 1], [0], [0]>} : vector<2x8x16xf32>, vector<2x8x16xf32>, vector<2x8x8xf32> -> vector<2x8x8xf32>
    "tpu.trace_stop"() : () -> ()
    %196 = vector.broadcast %6 : vector<2x1x8xf32> to vector<2x8x8xf32>
    %197 = arith.addf %195, %196 : vector<2x8x8xf32>
    %cst_63 = arith.constant dense<0xFF800000> : vector<2x8xf32>
    %198 = vector.multi_reduction <maximumf>, %197, %cst_63 [2] : vector<2x8x8xf32> to vector<2x8xf32>
    %199 = vector.shape_cast %198 : vector<2x8xf32> to vector<2x8x1xf32>
    %200 = vector.broadcast %199 : vector<2x8x1xf32> to vector<2x8x8xf32>
    %201 = arith.subf %197, %200 : vector<2x8x8xf32>
    %202 = math.exp %201 : vector<2x8x8xf32>
    %cst_64 = arith.constant dense<0.000000e+00> : vector<2x8xf32>
    %203 = vector.multi_reduction <add>, %202, %cst_64 [2] : vector<2x8x8xf32> to vector<2x8xf32>
    %204 = vector.shape_cast %203 : vector<2x8xf32> to vector<2x8x1xf32>
    %205 = tpu.reciprocal %204 {approx = true} : vector<2x8x1xf32> -> vector<2x8x1xf32>
    %206 = vector.broadcast %205 : vector<2x8x1xf32> to vector<2x8x8xf32>
    %207 = arith.mulf %202, %206 : vector<2x8x8xf32>
    "tpu.trace_start"() <{level = 10 : i32, message = "bqk,bkd->bqd"}> : () -> ()
    %cst_65 = arith.constant dense<0.000000e+00> : vector<2x8x16xf32>
    %208 = tpu.matmul %207, %194, %cst_65 {dimension_numbers = #tpu.dot_dimension_numbers<[2], [1], [1], [2], [0, 0, 0, 1, 1, 2], [0], [0]>} : vector<2x8x8xf32>, vector<2x8x16xf32>, vector<2x8x16xf32> -> vector<2x8x16xf32>
    "tpu.trace_stop"() : () -> ()
    %209 = vector.shape_cast %208 : vector<2x8x16xf32> to vector<16x16xf32>
    %210 = tpu.concatenate %186, %209 in 1 : vector<16x16xf32>, vector<16x16xf32> -> vector<16x32xf32>
    %c1_66 = arith.constant 1 : index
    %c0_67 = arith.constant 0 : index
    %c0_68 = arith.constant 0 : index
    %211 = vector.load %arg4[%c1_66, %c0_67, %c0_68] : memref<2x32x32xf32, #tpu.memory_space<vmem>>, vector<1x32x32xf32>
    %212 = vector.shape_cast %211 : vector<1x32x32xf32> to vector<32x32xf32>
    %cst_69 = arith.constant dense<0.000000e+00> : vector<16x32xf32>
    %213 = tpu.matmul %210, %212, %cst_69 {dimension_numbers = #tpu.dot_dimension_numbers<[1], [0], [0], [1], [0, 0, 1, 1], [], []>} : vector<16x32xf32>, vector<32x32xf32>, vector<16x32xf32> -> vector<16x32xf32>
    %214 = vector.broadcast %152 : vector<1x32xf32> to vector<16x32xf32>
    %215 = arith.addf %213, %214 : vector<16x32xf32>
    %216 = arith.addf %148, %215 : vector<16x32xf32>
    %cst_70 = arith.constant dense<0.000000e+00> : vector<16xf32>
    %217 = vector.multi_reduction <add>, %216, %cst_70 [1] : vector<16x32xf32> to vector<16xf32>
    %218 = vector.shape_cast %217 : vector<16xf32> to vector<16x1xf32>
    %cst_71 = arith.constant 3.200000e+01 : f32
    %219 = vector.broadcast %cst_71 : f32 to vector<16x1xf32>
    %220 = arith.divf %218, %219 : vector<16x1xf32>
    %221 = vector.broadcast %220 : vector<16x1xf32> to vector<16x32xf32>
    %222 = arith.subf %216, %221 : vector<16x32xf32>
    %223 = arith.mulf %222, %222 : vector<16x32xf32>
    %cst_72 = arith.constant dense<0.000000e+00> : vector<16xf32>
    %224 = vector.multi_reduction <add>, %223, %cst_72 [1] : vector<16x32xf32> to vector<16xf32>
    %225 = vector.shape_cast %224 : vector<16xf32> to vector<16x1xf32>
    %cst_73 = arith.constant 3.200000e+01 : f32
    %226 = vector.broadcast %cst_73 : f32 to vector<16x1xf32>
    %227 = arith.divf %225, %226 : vector<16x1xf32>
    %228 = vector.broadcast %220 : vector<16x1xf32> to vector<16x32xf32>
    %229 = arith.subf %216, %228 : vector<16x32xf32>
    %cst_74 = arith.constant 9.99999974E-6 : f32
    %230 = vector.broadcast %cst_74 : f32 to vector<16x1xf32>
    %231 = arith.addf %227, %230 : vector<16x1xf32>
    %232 = math.rsqrt %231 : vector<16x1xf32>
    %233 = vector.broadcast %232 : vector<16x1xf32> to vector<16x32xf32>
    %234 = arith.mulf %229, %233 : vector<16x32xf32>
    %235 = vector.broadcast %153 : vector<1x32xf32> to vector<16x32xf32>
    %236 = arith.mulf %234, %235 : vector<16x32xf32>
    %237 = vector.broadcast %154 : vector<1x32xf32> to vector<16x32xf32>
    %238 = arith.addf %236, %237 : vector<16x32xf32>
    %c1_75 = arith.constant 1 : index
    %c0_76 = arith.constant 0 : index
    %c0_77 = arith.constant 0 : index
    %239 = vector.load %arg5[%c1_75, %c0_76, %c0_77] : memref<2x32x64xf32, #tpu.memory_space<vmem>>, vector<1x32x64xf32>
    %240 = vector.shape_cast %239 : vector<1x32x64xf32> to vector<32x64xf32>
    %cst_78 = arith.constant dense<0.000000e+00> : vector<16x64xf32>
    %241 = tpu.matmul %238, %240, %cst_78 {dimension_numbers = #tpu.dot_dimension_numbers<[1], [0], [0], [1], [0, 0, 1, 1], [], []>} : vector<16x32xf32>, vector<32x64xf32>, vector<16x64xf32> -> vector<16x64xf32>
    %242 = vector.broadcast %155 : vector<1x64xf32> to vector<16x64xf32>
    %243 = arith.addf %241, %242 : vector<16x64xf32>
    %cst_79 = arith.constant 5.000000e-01 : f32
    %244 = vector.broadcast %cst_79 : f32 to vector<16x64xf32>
    %245 = arith.mulf %244, %243 : vector<16x64xf32>
    %cst_80 = arith.constant 4.471500e-02 : f32
    %246 = vector.broadcast %cst_80 : f32 to vector<16x64xf32>
    %247 = arith.mulf %246, %243 : vector<16x64xf32>
    %248 = arith.mulf %247, %243 : vector<16x64xf32>
    %249 = arith.mulf %248, %243 : vector<16x64xf32>
    %250 = arith.addf %243, %249 : vector<16x64xf32>
    %cst_81 = arith.constant 0.797884583 : f32
    %251 = vector.broadcast %cst_81 : f32 to vector<16x64xf32>
    %252 = arith.mulf %251, %250 : vector<16x64xf32>
    %253 = math.tanh %252 : vector<16x64xf32>
    %cst_82 = arith.constant 1.000000e+00 : f32
    %254 = vector.broadcast %cst_82 : f32 to vector<16x64xf32>
    %255 = arith.addf %254, %253 : vector<16x64xf32>
    %256 = arith.mulf %245, %255 : vector<16x64xf32>
    %c1_83 = arith.constant 1 : index
    %c0_84 = arith.constant 0 : index
    %c0_85 = arith.constant 0 : index
    %257 = vector.load %arg6[%c1_83, %c0_84, %c0_85] : memref<2x64x32xf32, #tpu.memory_space<vmem>>, vector<1x64x32xf32>
    %258 = vector.shape_cast %257 : vector<1x64x32xf32> to vector<64x32xf32>
    %cst_86 = arith.constant dense<0.000000e+00> : vector<16x32xf32>
    %259 = tpu.matmul %256, %258, %cst_86 {dimension_numbers = #tpu.dot_dimension_numbers<[1], [0], [0], [1], [0, 0, 1, 1], [], []>} : vector<16x64xf32>, vector<64x32xf32>, vector<16x32xf32> -> vector<16x32xf32>
    %260 = vector.broadcast %156 : vector<1x32xf32> to vector<16x32xf32>
    %261 = arith.addf %259, %260 : vector<16x32xf32>
    %262 = arith.addf %238, %261 : vector<16x32xf32>
    %cst_87 = arith.constant dense<0.000000e+00> : vector<16xf32>
    %263 = vector.multi_reduction <add>, %262, %cst_87 [1] : vector<16x32xf32> to vector<16xf32>
    %264 = vector.shape_cast %263 : vector<16xf32> to vector<16x1xf32>
    %cst_88 = arith.constant 3.200000e+01 : f32
    %265 = vector.broadcast %cst_88 : f32 to vector<16x1xf32>
    %266 = arith.divf %264, %265 : vector<16x1xf32>
    %267 = vector.broadcast %266 : vector<16x1xf32> to vector<16x32xf32>
    %268 = arith.subf %262, %267 : vector<16x32xf32>
    %269 = arith.mulf %268, %268 : vector<16x32xf32>
    %cst_89 = arith.constant dense<0.000000e+00> : vector<16xf32>
    %270 = vector.multi_reduction <add>, %269, %cst_89 [1] : vector<16x32xf32> to vector<16xf32>
    %271 = vector.shape_cast %270 : vector<16xf32> to vector<16x1xf32>
    %cst_90 = arith.constant 3.200000e+01 : f32
    %272 = vector.broadcast %cst_90 : f32 to vector<16x1xf32>
    %273 = arith.divf %271, %272 : vector<16x1xf32>
    %274 = vector.broadcast %266 : vector<16x1xf32> to vector<16x32xf32>
    %275 = arith.subf %262, %274 : vector<16x32xf32>
    %cst_91 = arith.constant 9.99999974E-6 : f32
    %276 = vector.broadcast %cst_91 : f32 to vector<16x1xf32>
    %277 = arith.addf %273, %276 : vector<16x1xf32>
    %278 = math.rsqrt %277 : vector<16x1xf32>
    %279 = vector.broadcast %278 : vector<16x1xf32> to vector<16x32xf32>
    %280 = arith.mulf %275, %279 : vector<16x32xf32>
    %281 = vector.broadcast %157 : vector<1x32xf32> to vector<16x32xf32>
    %282 = arith.mulf %280, %281 : vector<16x32xf32>
    %283 = vector.broadcast %158 : vector<1x32xf32> to vector<16x32xf32>
    %284 = arith.addf %282, %283 : vector<16x32xf32>
    %285 = vector.extract_strided_slice %284 {offsets = [0, 0], sizes = [1, 32], strides = [1, 1]} : vector<16x32xf32> to vector<1x32xf32>
    %286 = vector.extract_strided_slice %284 {offsets = [8, 0], sizes = [1, 32], strides = [1, 1]} : vector<16x32xf32> to vector<1x32xf32>
    %287 = tpu.concatenate %285, %286 in 0 : vector<1x32xf32>, vector<1x32xf32> -> vector<2x32xf32>
    %c0_92 = arith.constant 0 : index
    %c0_93 = arith.constant 0 : index
    %288 = vector.load %arg8[%c0_92, %c0_93] : memref<32x16xf32, #tpu.memory_space<vmem>>, vector<32x16xf32>
    %cst_94 = arith.constant dense<0.000000e+00> : vector<2x16xf32>
    %289 = tpu.matmul %287, %288, %cst_94 {dimension_numbers = #tpu.dot_dimension_numbers<[1], [0], [0], [1], [0, 0, 1, 1], [], []>} : vector<2x32xf32>, vector<32x16xf32>, vector<2x16xf32> -> vector<2x16xf32>
    %c0_95 = arith.constant 0 : index
    %c0_96 = arith.constant 0 : index
    %290 = vector.load %arg9[%c0_95, %c0_96] : memref<1x16xf32, #tpu.memory_space<vmem>>, vector<1x16xf32>
    %291 = vector.broadcast %290 : vector<1x16xf32> to vector<2x16xf32>
    %292 = arith.addf %289, %291 : vector<2x16xf32>
    %cst_97 = arith.constant dense<0.000000e+00> : vector<2xf32>
    %293 = vector.multi_reduction <add>, %292, %cst_97 [1] : vector<2x16xf32> to vector<2xf32>
    %294 = vector.shape_cast %293 : vector<2xf32> to vector<2x1xf32>
    %cst_98 = arith.constant 1.600000e+01 : f32
    %295 = vector.broadcast %cst_98 : f32 to vector<2x1xf32>
    %296 = arith.divf %294, %295 : vector<2x1xf32>
    %297 = vector.broadcast %296 : vector<2x1xf32> to vector<2x16xf32>
    %298 = arith.subf %292, %297 : vector<2x16xf32>
    %299 = arith.mulf %298, %298 : vector<2x16xf32>
    %cst_99 = arith.constant dense<0.000000e+00> : vector<2xf32>
    %300 = vector.multi_reduction <add>, %299, %cst_99 [1] : vector<2x16xf32> to vector<2xf32>
    %301 = vector.shape_cast %300 : vector<2xf32> to vector<2x1xf32>
    %cst_100 = arith.constant 1.600000e+01 : f32
    %302 = vector.broadcast %cst_100 : f32 to vector<2x1xf32>
    %303 = arith.divf %301, %302 : vector<2x1xf32>
    %304 = vector.broadcast %296 : vector<2x1xf32> to vector<2x16xf32>
    %305 = arith.subf %292, %304 : vector<2x16xf32>
    %cst_101 = arith.constant 9.99999996E-13 : f32
    %306 = vector.broadcast %cst_101 : f32 to vector<2x1xf32>
    %307 = arith.addf %303, %306 : vector<2x1xf32>
    %308 = math.rsqrt %307 : vector<2x1xf32>
    %309 = vector.broadcast %308 : vector<2x1xf32> to vector<2x16xf32>
    %310 = arith.mulf %305, %309 : vector<2x16xf32>
    %c0_102 = arith.constant 0 : index
    %c0_103 = arith.constant 0 : index
    %311 = vector.load %arg10[%c0_102, %c0_103] : memref<2x16xf32, #tpu.memory_space<vmem>>, vector<2x16xf32>
    tpu.vector_store %arg10[%c0_102, %c0_103], %310 {strides = array<i32>} : memref<2x16xf32, #tpu.memory_space<vmem>>, vector<2x16xf32>,
    return
  }
}

</mosaic_0001>

<llo_original>
// kernel: proj_encoder_forward.1
$region0: #{proj_encoder_forward.1}
  #allocation0 [shape = 'u32[]', space=smem, size = 0x4, offset = 0x4, fixed_abs, tag = 'smem constant byte address 0x4 - core index']
  #allocation1 [shape = 'u32[144,128]{1,0:T(1,128)}', space=vmem, size = 0x12000, scoped, tag = 'internal scratch']
  %s0 = inlined_call_operand.vmem [shape: s32[2,8], index: 0, kind: input, shape index: {}]
  %s1 = inlined_call_operand.vmem [shape: f32[16,32], index: 1, kind: input, shape index: {}]
  %s2 = inlined_call_operand.vmem [shape: f32[8,32], index: 2, kind: input, shape index: {}]
  %s3 = inlined_call_operand.vmem [shape: f32[2,32,96], index: 3, kind: input, shape index: {}]
  %s4 = inlined_call_operand.vmem [shape: f32[2,32,32], index: 4, kind: input, shape index: {}]
  %s5 = inlined_call_operand.vmem [shape: f32[2,32,64], index: 5, kind: input, shape index: {}]
  %s6 = inlined_call_operand.vmem [shape: f32[2,64,32], index: 6, kind: input, shape index: {}]
  %s7 = inlined_call_operand.vmem [shape: f32[2,8,96], index: 7, kind: input, shape index: {}]
  %s8 = inlined_call_operand.vmem [shape: f32[32,16], index: 8, kind: input, shape index: {}]
  %s9 = inlined_call_operand.vmem [shape: f32[1,16], index: 9, kind: input, shape index: {}]
  %s10 = inlined_call_operand.hbm [shape: f32[2,16], index: 10, kind: output, shape index: {}]
  %s11 = sld [smem:[#allocation0]]
  $region50: #{proj_encoder_forward.1} parent=0
    _
  %s13 = ssub.s32 1, %s11
  %s14 = scalar_select 0, %s13, %s11
  $region1: #{proj_encoder_forward.1} parent=0
    #allocation2 [shape = 'u8[1024]{0}', space=vmem, size = 0x400, scoped, tag = 'output window, operand 0, single buffered']
    #allocation3 [shape = 's32[1]{0}', space=sflag, size = 0x4, scoped, tag = 'scoped memory for proj_encoder_forward.1']
    %15 = vsyncpa [#allocation3], 0
    // Predicated region
    $region2: #{proj_encoder_forward.1} parent=1 // pred_check
      _
    $region3: #{proj_encoder_forward.1} parent=1 // pred_check_branch
      %17 = sbr.rel (0) target = $region5
    $region4: #{proj_encoder_forward.1} parent=1 // pred_region
      _
    $region5: #{proj_encoder_forward.1} parent=1 // pred_fallthru
      _
    // Predicated region
    $region6: #{proj_encoder_forward.1} parent=1 // pred_check
      _
    $region7: #{proj_encoder_forward.1} parent=1 // pred_check_branch
      %19 = sbr.rel (0) target = $region9
    $region8: #{proj_encoder_forward.1} parent=1 // pred_region
      _
    $region9: #{proj_encoder_forward.1} parent=1 // pred_fallthru
      _
    // Predicated region
    $region10: #{proj_encoder_forward.1} parent=1 // pred_check
      _
    $region11: #{proj_encoder_forward.1} parent=1 // pred_check_branch
      %21 = sbr.rel (0) target = $region13
    $region12: #{proj_encoder_forward.1} parent=1 // pred_region
      _
    $region13: #{proj_encoder_forward.1} parent=1 // pred_fallthru
      _
    // Predicated region
    $region14: #{proj_encoder_forward.1} parent=1 // pred_check
      _
    $region15: #{proj_encoder_forward.1} parent=1 // pred_check_branch
      %23 = sbr.rel (0) target = $region17
    $region16: #{proj_encoder_forward.1} parent=1 // pred_region
      _
    $region17: #{proj_encoder_forward.1} parent=1 // pred_fallthru
      _
    // Predicated region
    $region18: #{proj_encoder_forward.1} parent=1 // pred_check
      _
    $region19: #{proj_encoder_forward.1} parent=1 // pred_check_branch
      %25 = sbr.rel (0) target = $region21
    $region20: #{proj_encoder_forward.1} parent=1 // pred_region
      _
    $region21: #{proj_encoder_forward.1} parent=1 // pred_fallthru
      _
    // Predicated region
    $region22: #{proj_encoder_forward.1} parent=1 // pred_check
      _
    $region23: #{proj_encoder_forward.1} parent=1 // pred_check_branch
      %27 = sbr.rel (0) target = $region25
    $region24: #{proj_encoder_forward.1} parent=1 // pred_region
      _
    $region25: #{proj_encoder_forward.1} parent=1 // pred_fallthru
      _
    // Predicated region
    $region26: #{proj_encoder_forward.1} parent=1 // pred_check
      _
    $region27: #{proj_encoder_forward.1} parent=1 // pred_check_branch
      %29 = sbr.rel (0) target = $region29
    $region28: #{proj_encoder_forward.1} parent=1 // pred_region
      _
    $region29: #{proj_encoder_forward.1} parent=1 // pred_fallthru
      _
    // Predicated region
    $region30: #{proj_encoder_forward.1} parent=1 // pred_check
      _
    $region31: #{proj_encoder_forward.1} parent=1 // pred_check_branch
      %31 = sbr.rel (0) target = $region33
    $region32: #{proj_encoder_forward.1} parent=1 // pred_region
      _
    $region33: #{proj_encoder_forward.1} parent=1 // pred_fallthru
      _
    // Predicated region
    $region34: #{proj_encoder_forward.1} parent=1 // pred_check
      _
    $region35: #{proj_encoder_forward.1} parent=1 // pred_check_branch
      %33 = sbr.rel (0) target = $region37
    $region36: #{proj_encoder_forward.1} parent=1 // pred_region
      _
    $region37: #{proj_encoder_forward.1} parent=1 // pred_fallthru
      _
    // Predicated region
    $region38: #{proj_encoder_forward.1} parent=1 // pred_check
      _
    $region39: #{proj_encoder_forward.1} parent=1 // pred_check_branch
      %35 = sbr.rel (0) target = $region41
    $region40: #{proj_encoder_forward.1} parent=1 // pred_region
      _
    $region41: #{proj_encoder_forward.1} parent=1 // pred_fallthru
      _
    %v36 = vld [vmem:[%s0] sm:$0x3]
    %vm37 = vcmp.eq.s32.totalorder %v36, 0
    %v38 = vsel %vm37, -1e+30, 0.0
    %v41 = vunpack.c.l.s4 1966171168
    %v42 = vunpack.c.0.s8 %v41
    %v43 = vlaneseq
    %v44 = vshrl.u32 %v43, 7
    %v45 = vsub.s32 %v42, %v44
    %v46 = vrot.slane %v38, %v45
    %v47 = vcombine.high %v46, %v46
    %v49 = vunpack.c.l.s4 1966171168
    %v50 = vunpack.c.0.s8 %v49
    %v51 = vlaneseq
    %v52 = vshrl.u32 %v51, 7
    %v53 = vsub.s32 %v50, %v52
    %v54 = vrot.slane %v46, %v53
    %v56 = vunpack.c.l.s4 1966171168
    %v57 = vunpack.c.0.s8 %v56
    %v58 = vlaneseq
    %v59 = vshrl.u32 %v58, 7
    %v60 = vsub.s32 %v57, %v59
    %v61 = vrot.slane %v47, %v60
    %v62 = vld [vmem:[%s2] sm:$0xff]
    %v63 = vld [vmem:[%s1] sm:$0xff]
    %v64 = vld [vmem:[%s1 + $0x8] sm:$0xff]
    %v65 = vmul.f32 %v63, 5.656854
    %v66 = vmul.f32 %v64, 5.656854
    %v67 = vadd.f32 %v65, %v62
    %v68 = vadd.f32 %v66, %v62
    %v69 = vld [vmem:[%s7] sm:$0xff]
    %v70 = vld [vmem:[%s3] sm:$0xff]
    %v71 = vld [vmem:[%s3 + $0x8] sm:$0xff]
    %v72 = vld [vmem:[%s3 + $0x10] sm:$0xff]
    %v73 = vld [vmem:[%s3 + $0x18] sm:$0xff]
    %v74 = vlaneseq
    %v75 = vshrl.u32 %v74, 7
    %v76 = vsub.s32 0, %v75
    %v77 = vrot.slane %v69, %v76
    %vm78 = vcmask 261120
    %v80 = vsel %vm78, %v67, 0
    %v83 = vsel %vm78, %v68, 0
    %85 = vmatprep.subr.mxu0 0.0
    %86 = vmatpush1.msra.mxu0 0.0
    %87 = vmatprep.subr.mxu0 0.0
    %88 = vmatpush1.msra.mxu0 0.0
    %89 = vmatprep.subr.mxu0 0.0
    %90 = vmatpush1.msra.mxu0 0.0
    %91 = vmatprep.subr.mxu0 0.0
    %92 = vmatpush1.msra.mxu0 0.0
    %93 = vmatprep.subr.mxu0 0.0
    %94 = vmatpush1.msra.mxu0 0.0
    %95 = vmatprep.subr.mxu0 0.0
    %96 = vmatpush1.msra.mxu0 0.0
    %97 = vmatprep.subr.mxu0 0.0
    %98 = vmatpush1.msra.mxu0 0.0
    %99 = vmatprep.subr.mxu0 0.0
    %100 = vmatpush1.msra.mxu0 0.0
    %101 = vmatprep.subr.mxu0 0.0
    %102 = vmatpush1.msra.mxu0 0.0
    %103 = vmatprep.subr.mxu0 0.0
    %104 = vmatpush1.msra.mxu0 0.0
    %105 = vmatprep.subr.mxu0 0.0
    %106 = vmatpush1.msra.mxu0 0.0
    %107 = vmatprep.subr.mxu0 0.0
    %108 = vmatpush1.msra.mxu0 0.0
    %109 = vmatprep.subr.mxu0 0.0
    %110 = vmatpush1.msra.mxu0 %v73
    %111 = vmatprep.subr.mxu0 0.0
    %112 = vmatpush1.msra.mxu0 %v72
    %113 = vmatprep.subr.mxu0 0.0
    %114 = vmatpush1.msra.mxu0 %v71
    %115 = vmatprep.subr.mxu0 0.0
    %116 = vmatpush1.msra.mxu0 %v70
    %117 = vmatprep.subr.mxu0 0.0
    %118 = vmatpush2.msra.mxu0 0.0
    %119 = vmatprep.subr.mxu0 0.0
    %120 = vmatpush2.msra.mxu0 0.0
    %121 = vmatprep.subr.mxu0 0.0
    %122 = vmatpush2.msra.mxu0 0.0
    %123 = vmatprep.subr.mxu0 0.0
    %124 = vmatpush2.msra.mxu0 0.0
    %125 = vmatprep.subr.mxu0 0.0
    %126 = vmatpush2.msra.mxu0 0.0
    %127 = vmatprep.subr.mxu0 0.0
    %128 = vmatpush2.msra.mxu0 0.0
    %129 = vmatprep.subr.mxu0 0.0
    %130 = vmatpush2.msra.mxu0 0.0
    %131 = vmatprep.subr.mxu0 0.0
    %132 = vmatpush2.msra.mxu0 0.0
    %133 = vmatprep.subr.mxu0 0.0
    %134 = vmatpush2.msra.mxu0 0.0
    %135 = vmatprep.subr.mxu0 0.0
    %136 = vmatpush2.msra.mxu0 0.0
    %137 = vmatprep.subr.mxu0 0.0
    %138 = vmatpush2.msra.mxu0 0.0
    %139 = vmatprep.subr.mxu0 0.0
    %140 = vmatpush2.msra.mxu0 0.0
    %141 = vmatprep.subr.mxu0 0.0
    %142 = vmatpush2.msra.mxu0 0.0
    %143 = vmatprep.subr.mxu0 0.0
    %144 = vmatpush2.msra.mxu0 0.0
    %145 = vmatprep.subr.mxu0 0.0
    %146 = vmatpush2.msra.mxu0 0.0
    %147 = vmatprep.subr.mxu0 0.0
    %148 = vmatpush2.msra.mxu0 0.0
    %149 = vmatprep.mubr.f32.mxu0 0.0
    %150 = vmatmul.mubr.f32.gmra.mxu0 %v80
    %v151 = vpop.f32.mrf.mxu0
    %v152 = vadd.f32 %v77, %v151
    %v153 = vpop.f32.mrf.mxu0
    %154 = vmatprep.mubr.f32.mxu0 0.0
    %155 = vmatmul.mubr.f32.gmra.mxu0 %v83
    %v156 = vpop.f32.mrf.mxu0
    %v157 = vadd.f32 %v77, %v156
    %v158 = vpop.f32.mrf.mxu0
    %159 = vdwg.mxu0
    %v160 = vmul.f32 %v152, 0.25
    %v161 = vmul.f32 %v157, 0.25
    %v162 = vlaneseq
    %v163 = vshrl.u32 %v162, 7
    %v164 = vsub.s32 0, %v163
    %v165 = vrot.slane %v54, %v164
    %v166 = vlaneseq
    %v167 = vshrl.u32 %v166, 7
    %v168 = vsub.s32 0, %v167
    %v169 = vrot.slane %v61, %v168
    %173 = vrot.lane.b32.xlu0 %v152, 96
    %v174 = vpop.permute.xlu0 %173
    %vm175 = vcmask 130048
    %v177 = vsel %vm175, %v160, 0
    %v179 = vsel %vm175, %v174, 0
    %181 = vmatprep.subr.mxu0 0.0
    %182 = vmatpush1.xpose.msra.mxu0 0.0
    %183 = vmatprep.subr.mxu0 0.0
    %184 = vmatpush1.xpose.msra.mxu0 0.0
    %185 = vmatprep.subr.mxu0 0.0
    %186 = vmatpush1.xpose.msra.mxu0 0.0
    %187 = vmatprep.subr.mxu0 0.0
    %188 = vmatpush1.xpose.msra.mxu0 0.0
    %189 = vmatprep.subr.mxu0 0.0
    %190 = vmatpush1.xpose.msra.mxu0 0.0
    %191 = vmatprep.subr.mxu0 0.0
    %192 = vmatpush1.xpose.msra.mxu0 0.0
    %193 = vmatprep.subr.mxu0 0.0
    %194 = vmatpush1.xpose.msra.mxu0 0.0
    %195 = vmatprep.subr.mxu0 0.0
    %196 = vmatpush1.xpose.msra.mxu0 0.0
    %197 = vmatprep.subr.mxu0 0.0
    %198 = vmatpush1.xpose.msra.mxu0 0.0
    %199 = vmatprep.subr.mxu0 0.0
    %200 = vmatpush1.xpose.msra.mxu0 0.0
    %201 = vmatprep.subr.mxu0 0.0
    %202 = vmatpush1.xpose.msra.mxu0 0.0
    %203 = vmatprep.subr.mxu0 0.0
    %204 = vmatpush1.xpose.msra.mxu0 0.0
    %205 = vmatprep.subr.mxu0 0.0
    %206 = vmatpush1.xpose.msra.mxu0 0.0
    %207 = vmatprep.subr.mxu0 0.0
    %208 = vmatpush1.xpose.msra.mxu0 0.0
    %209 = vmatprep.subr.mxu0 0.0
    %210 = vmatpush1.xpose.msra.mxu0 0.0
    %211 = vmatprep.subr.mxu0 0.0
    %212 = vmatpush1.xpose.msra.mxu0 %v179
    %213 = vmatprep.subr.mxu0 0.0
    %214 = vmatpush2.xpose.msra.mxu0 0.0
    %215 = vmatprep.subr.mxu0 0.0
    %216 = vmatpush2.xpose.msra.mxu0 0.0
    %217 = vmatprep.subr.mxu0 0.0
    %218 = vmatpush2.xpose.msra.mxu0 0.0
    %219 = vmatprep.subr.mxu0 0.0
    %220 = vmatpush2.xpose.msra.mxu0 0.0
    %221 = vmatprep.subr.mxu0 0.0
    %222 = vmatpush2.xpose.msra.mxu0 0.0
    %223 = vmatprep.subr.mxu0 0.0
    %224 = vmatpush2.xpose.msra.mxu0 0.0
    %225 = vmatprep.subr.mxu0 0.0
    %226 = vmatpush2.xpose.msra.mxu0 0.0
    %227 = vmatprep.subr.mxu0 0.0
    %228 = vmatpush2.xpose.msra.mxu0 0.0
    %229 = vmatprep.subr.mxu0 0.0
    %230 = vmatpush2.xpose.msra.mxu0 0.0
    %231 = vmatprep.subr.mxu0 0.0
    %232 = vmatpush2.xpose.msra.mxu0 0.0
    %233 = vmatprep.subr.mxu0 0.0
    %234 = vmatpush2.xpose.msra.mxu0 0.0
    %235 = vmatprep.subr.mxu0 0.0
    %236 = vmatpush2.xpose.msra.mxu0 0.0
    %237 = vmatprep.subr.mxu0 0.0
    %238 = vmatpush2.xpose.msra.mxu0 0.0
    %239 = vmatprep.subr.mxu0 0.0
    %240 = vmatpush2.xpose.msra.mxu0 0.0
    %241 = vmatprep.subr.mxu0 0.0
    %242 = vmatpush2.xpose.msra.mxu0 0.0
    %243 = vmatprep.subr.mxu0 0.0
    %244 = vmatpush2.xpose.msra.mxu0 0.0
    %245 = vmatprep.mubr.f32.mxu0 0.0
    %246 = vmatmul.mubr.f32.gmra.mxu0 %v177
    %v247 = vpop.f32.mrf.mxu0
    %v248 = vadd.f32 %v165, %v247
    %v249 = vpop.f32.mrf.mxu0
    %250 = vdwg.mxu0
    %252 = vrot.lane.b32.xlu0 %v157, 96
    %v253 = vpop.permute.xlu0 %252
    %v255 = vsel %vm175, %v161, 0
    %v257 = vsel %vm175, %v253, 0
    %259 = vmatprep.subr.mxu0 0.0
    %260 = vmatpush1.xpose.msra.mxu0 0.0
    %261 = vmatprep.subr.mxu0 0.0
    %262 = vmatpush1.xpose.msra.mxu0 0.0
    %263 = vmatprep.subr.mxu0 0.0
    %264 = vmatpush1.xpose.msra.mxu0 0.0
    %265 = vmatprep.subr.mxu0 0.0
    %266 = vmatpush1.xpose.msra.mxu0 0.0
    %267 = vmatprep.subr.mxu0 0.0
    %268 = vmatpush1.xpose.msra.mxu0 0.0
    %269 = vmatprep.subr.mxu0 0.0
    %270 = vmatpush1.xpose.msra.mxu0 0.0
    %271 = vmatprep.subr.mxu0 0.0
    %272 = vmatpush1.xpose.msra.mxu0 0.0
    %273 = vmatprep.subr.mxu0 0.0
    %274 = vmatpush1.xpose.msra.mxu0 0.0
    %275 = vmatprep.subr.mxu0 0.0
    %276 = vmatpush1.xpose.msra.mxu0 0.0
    %277 = vmatprep.subr.mxu0 0.0
    %278 = vmatpush1.xpose.msra.mxu0 0.0
    %279 = vmatprep.subr.mxu0 0.0
    %280 = vmatpush1.xpose.msra.mxu0 0.0
    %281 = vmatprep.subr.mxu0 0.0
    %282 = vmatpush1.xpose.msra.mxu0 0.0
    %283 = vmatprep.subr.mxu0 0.0
    %284 = vmatpush1.xpose.msra.mxu0 0.0
    %285 = vmatprep.subr.mxu0 0.0
    %286 = vmatpush1.xpose.msra.mxu0 0.0
    %287 = vmatprep.subr.mxu0 0.0
    %288 = vmatpush1.xpose.msra.mxu0 0.0
    %289 = vmatprep.subr.mxu0 0.0
    %290 = vmatpush1.xpose.msra.mxu0 %v257
    %291 = vmatprep.subr.mxu0 0.0
    %292 = vmatpush2.xpose.msra.mxu0 0.0
    %293 = vmatprep.subr.mxu0 0.0
    %294 = vmatpush2.xpose.msra.mxu0 0.0
    %295 = vmatprep.subr.mxu0 0.0
    %296 = vmatpush2.xpose.msra.mxu0 0.0
    %297 = vmatprep.subr.mxu0 0.0
    %298 = vmatpush2.xpose.msra.mxu0 0.0
    %299 = vmatprep.subr.mxu0 0.0
    %300 = vmatpush2.xpose.msra.mxu0 0.0
    %301 = vmatprep.subr.mxu0 0.0
    %302 = vmatpush2.xpose.msra.mxu0 0.0
    %303 = vmatprep.subr.mxu0 0.0
    %304 = vmatpush2.xpose.msra.mxu0 0.0
    %305 = vmatprep.subr.mxu0 0.0
    %306 = vmatpush2.xpose.msra.mxu0 0.0
    %307 = vmatprep.subr.mxu0 0.0
    %308 = vmatpush2.xpose.msra.mxu0 0.0
    %309 = vmatprep.subr.mxu0 0.0
    %310 = vmatpush2.xpose.msra.mxu0 0.0
    %311 = vmatprep.subr.mxu0 0.0
    %312 = vmatpush2.xpose.msra.mxu0 0.0
    %313 = vmatprep.subr.mxu0 0.0
    %314 = vmatpush2.xpose.msra.mxu0 0.0
    %315 = vmatprep.subr.mxu0 0.0
    %316 = vmatpush2.xpose.msra.mxu0 0.0
    %317 = vmatprep.subr.mxu0 0.0
    %318 = vmatpush2.xpose.msra.mxu0 0.0
    %319 = vmatprep.subr.mxu0 0.0
    %320 = vmatpush2.xpose.msra.mxu0 0.0
    %321 = vmatprep.subr.mxu0 0.0
    %322 = vmatpush2.xpose.msra.mxu0 0.0
    %323 = vmatprep.mubr.f32.mxu0 0.0
    %324 = vmatmul.mubr.f32.gmra.mxu0 %v255
    %v325 = vpop.f32.mrf.mxu0
    %v326 = vadd.f32 %v169, %v325
    %v327 = vpop.f32.mrf.mxu0
    %328 = vdwg.mxu0
    %vm329 = vcmask 64512
    %v330 = vsel %vm329, %v248, -inf
    %331 = vmax.xlane.f32.xlu0 %v330
    %v332 = vpop.xlane.xlu0 %331
    %v333 = vsel %vm329, %v326, -inf
    %334 = vmax.xlane.f32.xlu0 %v333
    %v335 = vpop.xlane.xlu0 %334
    %v336 = vsub.f32 %v248, %v332
    %v337 = vsub.f32 %v326, %v335
    %v338 = vmul.f32 %v336, 1.442695
    %v339 = vpow.pop %v338
    %v340 = vmul.f32 %v337, 1.442695
    %v341 = vpow.pop %v340
    %v342 = vsel %vm329, %v339, 0.0
    %343 = vadd.xlane.f32.xlu0 %v342
    %v344 = vpop.xlane.xlu0 %343
    %v345 = vsel %vm329, %v341, 0.0
    %346 = vadd.xlane.f32.xlu0 %v345
    %v347 = vpop.xlane.xlu0 %346
    %v348 = vrcp.pop %v344
    %v349 = vrcp.pop %v347
    %v350 = vmul.f32 %v339, %v348
    %v351 = vmul.f32 %v341, %v349
    %352 = vrot.lane.b32.xlu0 %v152, 64
    %v353 = vpop.permute.xlu0 %352
    %v356 = vsel %vm329, %v350, 0
    %358 = vmatprep.subr.mxu0 0.0
    %359 = vmatpush1.msra.mxu0 0.0
    %360 = vmatprep.subr.mxu0 0.0
    %361 = vmatpush1.msra.mxu0 0.0
    %362 = vmatprep.subr.mxu0 0.0
    %363 = vmatpush1.msra.mxu0 0.0
    %364 = vmatprep.subr.mxu0 0.0
    %365 = vmatpush1.msra.mxu0 0.0
    %366 = vmatprep.subr.mxu0 0.0
    %367 = vmatpush1.msra.mxu0 0.0
    %368 = vmatprep.subr.mxu0 0.0
    %369 = vmatpush1.msra.mxu0 0.0
    %370 = vmatprep.subr.mxu0 0.0
    %371 = vmatpush1.msra.mxu0 0.0
    %372 = vmatprep.subr.mxu0 0.0
    %373 = vmatpush1.msra.mxu0 0.0
    %374 = vmatprep.subr.mxu0 0.0
    %375 = vmatpush1.msra.mxu0 0.0
    %376 = vmatprep.subr.mxu0 0.0
    %377 = vmatpush1.msra.mxu0 0.0
    %378 = vmatprep.subr.mxu0 0.0
    %379 = vmatpush1.msra.mxu0 0.0
    %380 = vmatprep.subr.mxu0 0.0
    %381 = vmatpush1.msra.mxu0 0.0
    %382 = vmatprep.subr.mxu0 0.0
    %383 = vmatpush1.msra.mxu0 0.0
    %384 = vmatprep.subr.mxu0 0.0
    %385 = vmatpush1.msra.mxu0 0.0
    %386 = vmatprep.subr.mxu0 0.0
    %387 = vmatpush1.msra.mxu0 0.0
    %388 = vmatprep.subr.mxu0 0.0
    %389 = vmatpush1.msra.mxu0 %v353
    %390 = vmatprep.subr.mxu0 0.0
    %391 = vmatpush2.msra.mxu0 0.0
    %392 = vmatprep.subr.mxu0 0.0
    %393 = vmatpush2.msra.mxu0 0.0
    %394 = vmatprep.subr.mxu0 0.0
    %395 = vmatpush2.msra.mxu0 0.0
    %396 = vmatprep.subr.mxu0 0.0
    %397 = vmatpush2.msra.mxu0 0.0
    %398 = vmatprep.subr.mxu0 0.0
    %399 = vmatpush2.msra.mxu0 0.0
    %400 = vmatprep.subr.mxu0 0.0
    %401 = vmatpush2.msra.mxu0 0.0
    %402 = vmatprep.subr.mxu0 0.0
    %403 = vmatpush2.msra.mxu0 0.0
    %404 = vmatprep.subr.mxu0 0.0
    %405 = vmatpush2.msra.mxu0 0.0
    %406 = vmatprep.subr.mxu0 0.0
    %407 = vmatpush2.msra.mxu0 0.0
    %408 = vmatprep.subr.mxu0 0.0
    %409 = vmatpush2.msra.mxu0 0.0
    %410 = vmatprep.subr.mxu0 0.0
    %411 = vmatpush2.msra.mxu0 0.0
    %412 = vmatprep.subr.mxu0 0.0
    %413 = vmatpush2.msra.mxu0 0.0
    %414 = vmatprep.subr.mxu0 0.0
    %415 = vmatpush2.msra.mxu0 0.0
    %416 = vmatprep.subr.mxu0 0.0
    %417 = vmatpush2.msra.mxu0 0.0
    %418 = vmatprep.subr.mxu0 0.0
    %419 = vmatpush2.msra.mxu0 0.0
    %420 = vmatprep.subr.mxu0 0.0
    %421 = vmatpush2.msra.mxu0 0.0
    %422 = vmatprep.mubr.f32.mxu0 0.0
    %423 = vmatmul.mubr.f32.gmra.mxu0 %v356
    %v424 = vpop.f32.mrf.mxu0
    %v425 = vadd.f32 0.0, %v424
    %v426 = vpop.f32.mrf.mxu0
    %427 = vdwg.mxu0
    %428 = vrot.lane.b32.xlu0 %v157, 64
    %v429 = vpop.permute.xlu0 %428
    %v432 = vsel %vm329, %v351, 0
    %434 = vmatprep.subr.mxu0 0.0
    %435 = vmatpush1.msra.mxu0 0.0
    %436 = vmatprep.subr.mxu0 0.0
    %437 = vmatpush1.msra.mxu0 0.0
    %438 = vmatprep.subr.mxu0 0.0
    %439 = vmatpush1.msra.mxu0 0.0
    %440 = vmatprep.subr.mxu0 0.0
    %441 = vmatpush1.msra.mxu0 0.0
    %442 = vmatprep.subr.mxu0 0.0
    %443 = vmatpush1.msra.mxu0 0.0
    %444 = vmatprep.subr.mxu0 0.0
    %445 = vmatpush1.msra.mxu0 0.0
    %446 = vmatprep.subr.mxu0 0.0
    %447 = vmatpush1.msra.mxu0 0.0
    %448 = vmatprep.subr.mxu0 0.0
    %449 = vmatpush1.msra.mxu0 0.0
    %450 = vmatprep.subr.mxu0 0.0
    %451 = vmatpush1.msra.mxu0 0.0
    %452 = vmatprep.subr.mxu0 0.0
    %453 = vmatpush1.msra.mxu0 0.0
    %454 = vmatprep.subr.mxu0 0.0
    %455 = vmatpush1.msra.mxu0 0.0
    %456 = vmatprep.subr.mxu0 0.0
    %457 = vmatpush1.msra.mxu0 0.0
    %458 = vmatprep.subr.mxu0 0.0
    %459 = vmatpush1.msra.mxu0 0.0
    %460 = vmatprep.subr.mxu0 0.0
    %461 = vmatpush1.msra.mxu0 0.0
    %462 = vmatprep.subr.mxu0 0.0
    %463 = vmatpush1.msra.mxu0 0.0
    %464 = vmatprep.subr.mxu0 0.0
    %465 = vmatpush1.msra.mxu0 %v429
    %466 = vmatprep.subr.mxu0 0.0
    %467 = vmatpush2.msra.mxu0 0.0
    %468 = vmatprep.subr.mxu0 0.0
    %469 = vmatpush2.msra.mxu0 0.0
    %470 = vmatprep.subr.mxu0 0.0
    %471 = vmatpush2.msra.mxu0 0.0
    %472 = vmatprep.subr.mxu0 0.0
    %473 = vmatpush2.msra.mxu0 0.0
    %474 = vmatprep.subr.mxu0 0.0
    %475 = vmatpush2.msra.mxu0 0.0
    %476 = vmatprep.subr.mxu0 0.0
    %477 = vmatpush2.msra.mxu0 0.0
    %478 = vmatprep.subr.mxu0 0.0
    %479 = vmatpush2.msra.mxu0 0.0
    %480 = vmatprep.subr.mxu0 0.0
    %481 = vmatpush2.msra.mxu0 0.0
    %482 = vmatprep.subr.mxu0 0.0
    %483 = vmatpush2.msra.mxu0 0.0
    %484 = vmatprep.subr.mxu0 0.0
    %485 = vmatpush2.msra.mxu0 0.0
    %486 = vmatprep.subr.mxu0 0.0
    %487 = vmatpush2.msra.mxu0 0.0
    %488 = vmatprep.subr.mxu0 0.0
    %489 = vmatpush2.msra.mxu0 0.0
    %490 = vmatprep.subr.mxu0 0.0
    %491 = vmatpush2.msra.mxu0 0.0
    %492 = vmatprep.subr.mxu0 0.0
    %493 = vmatpush2.msra.mxu0 0.0
    %494 = vmatprep.subr.mxu0 0.0
    %495 = vmatpush2.msra.mxu0 0.0
    %496 = vmatprep.subr.mxu0 0.0
    %497 = vmatpush2.msra.mxu0 0.0
    %498 = vmatprep.mubr.f32.mxu0 0.0
    %499 = vmatmul.mubr.f32.gmra.mxu0 %v432
    %v500 = vpop.f32.mrf.mxu0
    %v501 = vadd.f32 0.0, %v500
    %v502 = vpop.f32.mrf.mxu0
    %503 = vdwg.mxu0
    %504 = vrot.lane.b32.xlu0 %v160, 112
    %v505 = vpop.permute.xlu0 %504
    %506 = vrot.lane.b32.xlu0 %v152, 80
    %v507 = vpop.permute.xlu0 %506
    %v508 = vsel %vm175, %v505, 0
    %v510 = vsel %vm175, %v507, 0
    %512 = vmatprep.subr.mxu0 0.0
    %513 = vmatpush1.xpose.msra.mxu0 0.0
    %514 = vmatprep.subr.mxu0 0.0
    %515 = vmatpush1.xpose.msra.mxu0 0.0
    %516 = vmatprep.subr.mxu0 0.0
    %517 = vmatpush1.xpose.msra.mxu0 0.0
    %518 = vmatprep.subr.mxu0 0.0
    %519 = vmatpush1.xpose.msra.mxu0 0.0
    %520 = vmatprep.subr.mxu0 0.0
    %521 = vmatpush1.xpose.msra.mxu0 0.0
    %522 = vmatprep.subr.mxu0 0.0
    %523 = vmatpush1.xpose.msra.mxu0 0.0
    %524 = vmatprep.subr.mxu0 0.0
    %525 = vmatpush1.xpose.msra.mxu0 0.0
    %526 = vmatprep.subr.mxu0 0.0
    %527 = vmatpush1.xpose.msra.mxu0 0.0
    %528 = vmatprep.subr.mxu0 0.0
    %529 = vmatpush1.xpose.msra.mxu0 0.0
    %530 = vmatprep.subr.mxu0 0.0
    %531 = vmatpush1.xpose.msra.mxu0 0.0
    %532 = vmatprep.subr.mxu0 0.0
    %533 = vmatpush1.xpose.msra.mxu0 0.0
    %534 = vmatprep.subr.mxu0 0.0
    %535 = vmatpush1.xpose.msra.mxu0 0.0
    %536 = vmatprep.subr.mxu0 0.0
    %537 = vmatpush1.xpose.msra.mxu0 0.0
    %538 = vmatprep.subr.mxu0 0.0
    %539 = vmatpush1.xpose.msra.mxu0 0.0
    %540 = vmatprep.subr.mxu0 0.0
    %541 = vmatpush1.xpose.msra.mxu0 0.0
    %542 = vmatprep.subr.mxu0 0.0
    %543 = vmatpush1.xpose.msra.mxu0 %v510
    %544 = vmatprep.subr.mxu0 0.0
    %545 = vmatpush2.xpose.msra.mxu0 0.0
    %546 = vmatprep.subr.mxu0 0.0
    %547 = vmatpush2.xpose.msra.mxu0 0.0
    %548 = vmatprep.subr.mxu0 0.0
    %549 = vmatpush2.xpose.msra.mxu0 0.0
    %550 = vmatprep.subr.mxu0 0.0
    %551 = vmatpush2.xpose.msra.mxu0 0.0
    %552 = vmatprep.subr.mxu0 0.0
    %553 = vmatpush2.xpose.msra.mxu0 0.0
    %554 = vmatprep.subr.mxu0 0.0
    %555 = vmatpush2.xpose.msra.mxu0 0.0
    %556 = vmatprep.subr.mxu0 0.0
    %557 = vmatpush2.xpose.msra.mxu0 0.0
    %558 = vmatprep.subr.mxu0 0.0
    %559 = vmatpush2.xpose.msra.mxu0 0.0
    %560 = vmatprep.subr.mxu0 0.0
    %561 = vmatpush2.xpose.msra.mxu0 0.0
    %562 = vmatprep.subr.mxu0 0.0
    %563 = vmatpush2.xpose.msra.mxu0 0.0
    %564 = vmatprep.subr.mxu0 0.0
    %565 = vmatpush2.xpose.msra.mxu0 0.0
    %566 = vmatprep.subr.mxu0 0.0
    %567 = vmatpush2.xpose.msra.mxu0 0.0
    %568 = vmatprep.subr.mxu0 0.0
    %569 = vmatpush2.xpose.msra.mxu0 0.0
    %570 = vmatprep.subr.mxu0 0.0
    %571 = vmatpush2.xpose.msra.mxu0 0.0
    %572 = vmatprep.subr.mxu0 0.0
    %573 = vmatpush2.xpose.msra.mxu0 0.0
    %574 = vmatprep.subr.mxu0 0.0
    %575 = vmatpush2.xpose.msra.mxu0 0.0
    %576 = vmatprep.mubr.f32.mxu0 0.0
    %577 = vmatmul.mubr.f32.gmra.mxu0 %v508
    %v578 = vpop.f32.mrf.mxu0
    %v579 = vadd.f32 %v165, %v578
    %v580 = vpop.f32.mrf.mxu0
    %581 = vdwg.mxu0
    %582 = vrot.lane.b32.xlu0 %v161, 112
    %v583 = vpop.permute.xlu0 %582
    %584 = vrot.lane.b32.xlu0 %v157, 80
    %v585 = vpop.permute.xlu0 %584
    %v586 = vsel %vm175, %v583, 0
    %v588 = vsel %vm175, %v585, 0
    %590 = vmatprep.subr.mxu0 0.0
    %591 = vmatpush1.xpose.msra.mxu0 0.0
    %592 = vmatprep.subr.mxu0 0.0
    %593 = vmatpush1.xpose.msra.mxu0 0.0
    %594 = vmatprep.subr.mxu0 0.0
    %595 = vmatpush1.xpose.msra.mxu0 0.0
    %596 = vmatprep.subr.mxu0 0.0
    %597 = vmatpush1.xpose.msra.mxu0 0.0
    %598 = vmatprep.subr.mxu0 0.0
    %599 = vmatpush1.xpose.msra.mxu0 0.0
    %600 = vmatprep.subr.mxu0 0.0
    %601 = vmatpush1.xpose.msra.mxu0 0.0
    %602 = vmatprep.subr.mxu0 0.0
    %603 = vmatpush1.xpose.msra.mxu0 0.0
    %604 = vmatprep.subr.mxu0 0.0
    %605 = vmatpush1.xpose.msra.mxu0 0.0
    %606 = vmatprep.subr.mxu0 0.0
    %607 = vmatpush1.xpose.msra.mxu0 0.0
    %608 = vmatprep.subr.mxu0 0.0
    %609 = vmatpush1.xpose.msra.mxu0 0.0
    %610 = vmatprep.subr.mxu0 0.0
    %611 = vmatpush1.xpose.msra.mxu0 0.0
    %612 = vmatprep.subr.mxu0 0.0
    %613 = vmatpush1.xpose.msra.mxu0 0.0
    %614 = vmatprep.subr.mxu0 0.0
    %615 = vmatpush1.xpose.msra.mxu0 0.0
    %616 = vmatprep.subr.mxu0 0.0
    %617 = vmatpush1.xpose.msra.mxu0 0.0
    %618 = vmatprep.subr.mxu0 0.0
    %619 = vmatpush1.xpose.msra.mxu0 0.0
    %620 = vmatprep.subr.mxu0 0.0
    %621 = vmatpush1.xpose.msra.mxu0 %v588
    %622 = vmatprep.subr.mxu0 0.0
    %623 = vmatpush2.xpose.msra.mxu0 0.0
    %624 = vmatprep.subr.mxu0 0.0
    %625 = vmatpush2.xpose.msra.mxu0 0.0
    %626 = vmatprep.subr.mxu0 0.0
    %627 = vmatpush2.xpose.msra.mxu0 0.0
    %628 = vmatprep.subr.mxu0 0.0
    %629 = vmatpush2.xpose.msra.mxu0 0.0
    %630 = vmatprep.subr.mxu0 0.0
    %631 = vmatpush2.xpose.msra.mxu0 0.0
    %632 = vmatprep.subr.mxu0 0.0
    %633 = vmatpush2.xpose.msra.mxu0 0.0
    %634 = vmatprep.subr.mxu0 0.0
    %635 = vmatpush2.xpose.msra.mxu0 0.0
    %636 = vmatprep.subr.mxu0 0.0
    %637 = vmatpush2.xpose.msra.mxu0 0.0
    %638 = vmatprep.subr.mxu0 0.0
    %639 = vmatpush2.xpose.msra.mxu0 0.0
    %640 = vmatprep.subr.mxu0 0.0
    %641 = vmatpush2.xpose.msra.mxu0 0.0
    %642 = vmatprep.subr.mxu0 0.0
    %643 = vmatpush2.xpose.msra.mxu0 0.0
    %644 = vmatprep.subr.mxu0 0.0
    %645 = vmatpush2.xpose.msra.mxu0 0.0
    %646 = vmatprep.subr.mxu0 0.0
    %647 = vmatpush2.xpose.msra.mxu0 0.0
    %648 = vmatprep.subr.mxu0 0.0
    %649 = vmatpush2.xpose.msra.mxu0 0.0
    %650 = vmatprep.subr.mxu0 0.0
    %651 = vmatpush2.xpose.msra.mxu0 0.0
    %652 = vmatprep.subr.mxu0 0.0
    %653 = vmatpush2.xpose.msra.mxu0 0.0
    %654 = vmatprep.mubr.f32.mxu0 0.0
    %655 = vmatmul.mubr.f32.gmra.mxu0 %v586
    %v656 = vpop.f32.mrf.mxu0
    %v657 = vadd.f32 %v169, %v656
    %v658 = vpop.f32.mrf.mxu0
    %659 = vdwg.mxu0
    %v660 = vsel %vm329, %v579, -inf
    %661 = vmax.xlane.f32.xlu0 %v660
    %v662 = vpop.xlane.xlu0 %661
    %v663 = vsel %vm329, %v657, -inf
    %664 = vmax.xlane.f32.xlu0 %v663
    %v665 = vpop.xlane.xlu0 %664
    %v666 = vsub.f32 %v579, %v662
    %v667 = vsub.f32 %v657, %v665
    %v668 = vmul.f32 %v666, 1.442695
    %v669 = vpow.pop %v668
    %v670 = vmul.f32 %v667, 1.442695
    %v671 = vpow.pop %v670
    %v672 = vsel %vm329, %v669, 0.0
    %673 = vadd.xlane.f32.xlu0 %v672
    %v674 = vpop.xlane.xlu0 %673
    %v675 = vsel %vm329, %v671, 0.0
    %676 = vadd.xlane.f32.xlu0 %v675
    %v677 = vpop.xlane.xlu0 %676
    %v678 = vrcp.pop %v674
    %v679 = vrcp.pop %v677
    %v680 = vmul.f32 %v669, %v678
    %v681 = vmul.f32 %v671, %v679
    %682 = vrot.lane.b32.xlu0 %v152, 48
    %v683 = vpop.permute.xlu0 %682
    %v686 = vsel %vm329, %v680, 0
    %688 = vmatprep.subr.mxu0 0.0
    %689 = vmatpush1.msra.mxu0 0.0
    %690 = vmatprep.subr.mxu0 0.0
    %691 = vmatpush1.msra.mxu0 0.0
    %692 = vmatprep.subr.mxu0 0.0
    %693 = vmatpush1.msra.mxu0 0.0
    %694 = vmatprep.subr.mxu0 0.0
    %695 = vmatpush1.msra.mxu0 0.0
    %696 = vmatprep.subr.mxu0 0.0
    %697 = vmatpush1.msra.mxu0 0.0
    %698 = vmatprep.subr.mxu0 0.0
    %699 = vmatpush1.msra.mxu0 0.0
    %700 = vmatprep.subr.mxu0 0.0
    %701 = vmatpush1.msra.mxu0 0.0
    %702 = vmatprep.subr.mxu0 0.0
    %703 = vmatpush1.msra.mxu0 0.0
    %704 = vmatprep.subr.mxu0 0.0
    %705 = vmatpush1.msra.mxu0 0.0
    %706 = vmatprep.subr.mxu0 0.0
    %707 = vmatpush1.msra.mxu0 0.0
    %708 = vmatprep.subr.mxu0 0.0
    %709 = vmatpush1.msra.mxu0 0.0
    %710 = vmatprep.subr.mxu0 0.0
    %711 = vmatpush1.msra.mxu0 0.0
    %712 = vmatprep.subr.mxu0 0.0
    %713 = vmatpush1.msra.mxu0 0.0
    %714 = vmatprep.subr.mxu0 0.0
    %715 = vmatpush1.msra.mxu0 0.0
    %716 = vmatprep.subr.mxu0 0.0
    %717 = vmatpush1.msra.mxu0 0.0
    %718 = vmatprep.subr.mxu0 0.0
    %719 = vmatpush1.msra.mxu0 %v683
    %720 = vmatprep.subr.mxu0 0.0
    %721 = vmatpush2.msra.mxu0 0.0
    %722 = vmatprep.subr.mxu0 0.0
    %723 = vmatpush2.msra.mxu0 0.0
    %724 = vmatprep.subr.mxu0 0.0
    %725 = vmatpush2.msra.mxu0 0.0
    %726 = vmatprep.subr.mxu0 0.0
    %727 = vmatpush2.msra.mxu0 0.0
    %728 = vmatprep.subr.mxu0 0.0
    %729 = vmatpush2.msra.mxu0 0.0
    %730 = vmatprep.subr.mxu0 0.0
    %731 = vmatpush2.msra.mxu0 0.0
    %732 = vmatprep.subr.mxu0 0.0
    %733 = vmatpush2.msra.mxu0 0.0
    %734 = vmatprep.subr.mxu0 0.0
    %735 = vmatpush2.msra.mxu0 0.0
    %736 = vmatprep.subr.mxu0 0.0
    %737 = vmatpush2.msra.mxu0 0.0
    %738 = vmatprep.subr.mxu0 0.0
    %739 = vmatpush2.msra.mxu0 0.0
    %740 = vmatprep.subr.mxu0 0.0
    %741 = vmatpush2.msra.mxu0 0.0
    %742 = vmatprep.subr.mxu0 0.0
    %743 = vmatpush2.msra.mxu0 0.0
    %744 = vmatprep.subr.mxu0 0.0
    %745 = vmatpush2.msra.mxu0 0.0
    %746 = vmatprep.subr.mxu0 0.0
    %747 = vmatpush2.msra.mxu0 0.0
    %748 = vmatprep.subr.mxu0 0.0
    %749 = vmatpush2.msra.mxu0 0.0
    %750 = vmatprep.subr.mxu0 0.0
    %751 = vmatpush2.msra.mxu0 0.0
    %752 = vmatprep.mubr.f32.mxu0 0.0
    %753 = vmatmul.mubr.f32.gmra.mxu0 %v686
    %v754 = vpop.f32.mrf.mxu0
    %v755 = vadd.f32 0.0, %v754
    %v756 = vpop.f32.mrf.mxu0
    %757 = vdwg.mxu0
    %758 = vrot.lane.b32.xlu0 %v157, 48
    %v759 = vpop.permute.xlu0 %758
    %v762 = vsel %vm329, %v681, 0
    %764 = vmatprep.subr.mxu0 0.0
    %765 = vmatpush1.msra.mxu0 0.0
    %766 = vmatprep.subr.mxu0 0.0
    %767 = vmatpush1.msra.mxu0 0.0
    %768 = vmatprep.subr.mxu0 0.0
    %769 = vmatpush1.msra.mxu0 0.0
    %770 = vmatprep.subr.mxu0 0.0
    %771 = vmatpush1.msra.mxu0 0.0
    %772 = vmatprep.subr.mxu0 0.0
    %773 = vmatpush1.msra.mxu0 0.0
    %774 = vmatprep.subr.mxu0 0.0
    %775 = vmatpush1.msra.mxu0 0.0
    %776 = vmatprep.subr.mxu0 0.0
    %777 = vmatpush1.msra.mxu0 0.0
    %778 = vmatprep.subr.mxu0 0.0
    %779 = vmatpush1.msra.mxu0 0.0
    %780 = vmatprep.subr.mxu0 0.0
    %781 = vmatpush1.msra.mxu0 0.0
    %782 = vmatprep.subr.mxu0 0.0
    %783 = vmatpush1.msra.mxu0 0.0
    %784 = vmatprep.subr.mxu0 0.0
    %785 = vmatpush1.msra.mxu0 0.0
    %786 = vmatprep.subr.mxu0 0.0
    %787 = vmatpush1.msra.mxu0 0.0
    %788 = vmatprep.subr.mxu0 0.0
    %789 = vmatpush1.msra.mxu0 0.0
    %790 = vmatprep.subr.mxu0 0.0
    %791 = vmatpush1.msra.mxu0 0.0
    %792 = vmatprep.subr.mxu0 0.0
    %793 = vmatpush1.msra.mxu0 0.0
    %794 = vmatprep.subr.mxu0 0.0
    %795 = vmatpush1.msra.mxu0 %v759
    %796 = vmatprep.subr.mxu0 0.0
    %797 = vmatpush2.msra.mxu0 0.0
    %798 = vmatprep.subr.mxu0 0.0
    %799 = vmatpush2.msra.mxu0 0.0
    %800 = vmatprep.subr.mxu0 0.0
    %801 = vmatpush2.msra.mxu0 0.0
    %802 = vmatprep.subr.mxu0 0.0
    %803 = vmatpush2.msra.mxu0 0.0
    %804 = vmatprep.subr.mxu0 0.0
    %805 = vmatpush2.msra.mxu0 0.0
    %806 = vmatprep.subr.mxu0 0.0
    %807 = vmatpush2.msra.mxu0 0.0
    %808 = vmatprep.subr.mxu0 0.0
    %809 = vmatpush2.msra.mxu0 0.0
    %810 = vmatprep.subr.mxu0 0.0
    %811 = vmatpush2.msra.mxu0 0.0
    %812 = vmatprep.subr.mxu0 0.0
    %813 = vmatpush2.msra.mxu0 0.0
    %814 = vmatprep.subr.mxu0 0.0
    %815 = vmatpush2.msra.mxu0 0.0
    %816 = vmatprep.subr.mxu0 0.0
    %817 = vmatpush2.msra.mxu0 0.0
    %818 = vmatprep.subr.mxu0 0.0
    %819 = vmatpush2.msra.mxu0 0.0
    %820 = vmatprep.subr.mxu0 0.0
    %821 = vmatpush2.msra.mxu0 0.0
    %822 = vmatprep.subr.mxu0 0.0
    %823 = vmatpush2.msra.mxu0 0.0
    %824 = vmatprep.subr.mxu0 0.0
    %825 = vmatpush2.msra.mxu0 0.0
    %826 = vmatprep.subr.mxu0 0.0
    %827 = vmatpush2.msra.mxu0 0.0
    %828 = vmatprep.mubr.f32.mxu0 0.0
    %829 = vmatmul.mubr.f32.gmra.mxu0 %v762
    %v830 = vpop.f32.mrf.mxu0
    %v831 = vadd.f32 0.0, %v830
    %v832 = vpop.f32.mrf.mxu0
    %833 = vdwg.mxu0
    %836 = vrot.lane.b32.xlu0 %v755, 16
    %v837 = vpop.permute.xlu0 %836
    %838 = vrot.lane.b32.xlu0 %v831, 16
    %v839 = vpop.permute.xlu0 %838
    %v842 = vsel %vm175, %v425, %v837
    %v843 = vsel %vm175, %v501, %v839
    %v844 = vld [vmem:[%s4] sm:$0xff]
    %v845 = vld [vmem:[%s4 + $0x8] sm:$0xff]
    %v846 = vld [vmem:[%s4 + $0x10] sm:$0xff]
    %v847 = vld [vmem:[%s4 + $0x18] sm:$0xff]
    %v848 = vlaneseq
    %v849 = vshrl.u32 %v848, 7
    %v850 = vsub.s32 1, %v849
    %v851 = vrot.slane %v69, %v850
    %v853 = vsel %vm78, %v842, 0
    %v856 = vsel %vm78, %v843, 0
    %858 = vmatprep.subr.mxu0 0.0
    %859 = vmatpush1.msra.mxu0 0.0
    %860 = vmatprep.subr.mxu0 0.0
    %861 = vmatpush1.msra.mxu0 0.0
    %862 = vmatprep.subr.mxu0 0.0
    %863 = vmatpush1.msra.mxu0 0.0
    %864 = vmatprep.subr.mxu0 0.0
    %865 = vmatpush1.msra.mxu0 0.0
    %866 = vmatprep.subr.mxu0 0.0
    %867 = vmatpush1.msra.mxu0 0.0
    %868 = vmatprep.subr.mxu0 0.0
    %869 = vmatpush1.msra.mxu0 0.0
    %870 = vmatprep.subr.mxu0 0.0
    %871 = vmatpush1.msra.mxu0 0.0
    %872 = vmatprep.subr.mxu0 0.0
    %873 = vmatpush1.msra.mxu0 0.0
    %874 = vmatprep.subr.mxu0 0.0
    %875 = vmatpush1.msra.mxu0 0.0
    %876 = vmatprep.subr.mxu0 0.0
    %877 = vmatpush1.msra.mxu0 0.0
    %878 = vmatprep.subr.mxu0 0.0
    %879 = vmatpush1.msra.mxu0 0.0
    %880 = vmatprep.subr.mxu0 0.0
    %881 = vmatpush1.msra.mxu0 0.0
    %882 = vmatprep.subr.mxu0 0.0
    %883 = vmatpush1.msra.mxu0 %v847
    %884 = vmatprep.subr.mxu0 0.0
    %885 = vmatpush1.msra.mxu0 %v846
    %886 = vmatprep.subr.mxu0 0.0
    %887 = vmatpush1.msra.mxu0 %v845
    %888 = vmatprep.subr.mxu0 0.0
    %889 = vmatpush1.msra.mxu0 %v844
    %890 = vmatprep.subr.mxu0 0.0
    %891 = vmatpush2.msra.mxu0 0.0
    %892 = vmatprep.subr.mxu0 0.0
    %893 = vmatpush2.msra.mxu0 0.0
    %894 = vmatprep.subr.mxu0 0.0
    %895 = vmatpush2.msra.mxu0 0.0
    %896 = vmatprep.subr.mxu0 0.0
    %897 = vmatpush2.msra.mxu0 0.0
    %898 = vmatprep.subr.mxu0 0.0
    %899 = vmatpush2.msra.mxu0 0.0
    %900 = vmatprep.subr.mxu0 0.0
    %901 = vmatpush2.msra.mxu0 0.0
    %902 = vmatprep.subr.mxu0 0.0
    %903 = vmatpush2.msra.mxu0 0.0
    %904 = vmatprep.subr.mxu0 0.0
    %905 = vmatpush2.msra.mxu0 0.0
    %906 = vmatprep.subr.mxu0 0.0
    %907 = vmatpush2.msra.mxu0 0.0
    %908 = vmatprep.subr.mxu0 0.0
    %909 = vmatpush2.msra.mxu0 0.0
    %910 = vmatprep.subr.mxu0 0.0
    %911 = vmatpush2.msra.mxu0 0.0
    %912 = vmatprep.subr.mxu0 0.0
    %913 = vmatpush2.msra.mxu0 0.0
    %914 = vmatprep.subr.mxu0 0.0
    %915 = vmatpush2.msra.mxu0 0.0
    %916 = vmatprep.subr.mxu0 0.0
    %917 = vmatpush2.msra.mxu0 0.0
    %918 = vmatprep.subr.mxu0 0.0
    %919 = vmatpush2.msra.mxu0 0.0
    %920 = vmatprep.subr.mxu0 0.0
    %921 = vmatpush2.msra.mxu0 0.0
    %922 = vmatprep.mubr.f32.mxu0 0.0
    %923 = vmatmul.mubr.f32.gmra.mxu0 %v853
    %v924 = vpop.f32.mrf.mxu0
    %v925 = vadd.f32 %v851, %v924
    %v926 = vpop.f32.mrf.mxu0
    %927 = vmatprep.mubr.f32.mxu0 0.0
    %928 = vmatmul.mubr.f32.gmra.mxu0 %v856
    %v929 = vpop.f32.mrf.mxu0
    %v930 = vadd.f32 %v851, %v929
    %v931 = vpop.f32.mrf.mxu0
    %932 = vdwg.mxu0
    %v933 = vadd.f32 %v67, %v925
    %v934 = vadd.f32 %v68, %v930
    %v935 = vsel %vm78, %v933, 0.0
    %936 = vadd.xlane.f32.xlu0 %v935
    %v937 = vpop.xlane.xlu0 %936
    %v938 = vsel %vm78, %v934, 0.0
    %939 = vadd.xlane.f32.xlu0 %v938
    %v940 = vpop.xlane.xlu0 %939
    %v941 = vrcp.pop 32.0
    %v942 = vmul.f32 %v937, %v941
    %v943 = vmul.f32 %v940, %v941
    %v944 = vsub.f32 %v933, %v942
    %v945 = vsub.f32 %v934, %v943
    %v946 = vmul.f32 %v944, %v944
    %v947 = vmul.f32 %v945, %v945
    %v948 = vsel %vm78, %v946, 0.0
    %949 = vadd.xlane.f32.xlu0 %v948
    %v950 = vpop.xlane.xlu0 %949
    %v951 = vsel %vm78, %v947, 0.0
    %952 = vadd.xlane.f32.xlu0 %v951
    %v953 = vpop.xlane.xlu0 %952
    %v954 = vmul.f32 %v950, %v941
    %v955 = vmul.f32 %v953, %v941
    %v956 = vadd.f32 %v954, 1e-05
    %v957 = vadd.f32 %v955, 1e-05
    %v958 = vrsqrt.pop %v956
    %v959 = vrsqrt.pop %v957
    %v960 = vmul.f32 %v944, %v958
    %v961 = vmul.f32 %v945, %v959
    %v962 = vlaneseq
    %v963 = vshrl.u32 %v962, 7
    %v964 = vsub.s32 2, %v963
    %v965 = vrot.slane %v69, %v964
    %v966 = vmul.f32 %v960, %v965
    %v967 = vmul.f32 %v961, %v965
    %v968 = vlaneseq
    %v969 = vshrl.u32 %v968, 7
    %v970 = vsub.s32 3, %v969
    %v971 = vrot.slane %v69, %v970
    %v972 = vadd.f32 %v966, %v971
    %v973 = vadd.f32 %v967, %v971
    %v974 = vld [vmem:[%s5] sm:$0xff]
    %v975 = vld [vmem:[%s5 + $0x8] sm:$0xff]
    %v976 = vld [vmem:[%s5 + $0x10] sm:$0xff]
    %v977 = vld [vmem:[%s5 + $0x18] sm:$0xff]
    %v978 = vlaneseq
    %v979 = vshrl.u32 %v978, 7
    %v980 = vsub.s32 4, %v979
    %v981 = vrot.slane %v69, %v980
    %v983 = vsel %vm78, %v972, 0
    %v986 = vsel %vm78, %v973, 0
    %988 = vmatprep.subr.mxu0 0.0
    %989 = vmatpush1.msra.mxu0 0.0
    %990 = vmatprep.subr.mxu0 0.0
    %991 = vmatpush1.msra.mxu0 0.0
    %992 = vmatprep.subr.mxu0 0.0
    %993 = vmatpush1.msra.mxu0 0.0
    %994 = vmatprep.subr.mxu0 0.0
    %995 = vmatpush1.msra.mxu0 0.0
    %996 = vmatprep.subr.mxu0 0.0
    %997 = vmatpush1.msra.mxu0 0.0
    %998 = vmatprep.subr.mxu0 0.0
    %999 = vmatpush1.msra.mxu0 0.0
    %1000 = vmatprep.subr.mxu0 0.0
    %1001 = vmatpush1.msra.mxu0 0.0
    %1002 = vmatprep.subr.mxu0 0.0
    %1003 = vmatpush1.msra.mxu0 0.0
    %1004 = vmatprep.subr.mxu0 0.0
    %1005 = vmatpush1.msra.mxu0 0.0
    %1006 = vmatprep.subr.mxu0 0.0
    %1007 = vmatpush1.msra.mxu0 0.0
    %1008 = vmatprep.subr.mxu0 0.0
    %1009 = vmatpush1.msra.mxu0 0.0
    %1010 = vmatprep.subr.mxu0 0.0
    %1011 = vmatpush1.msra.mxu0 0.0
    %1012 = vmatprep.subr.mxu0 0.0
    %1013 = vmatpush1.msra.mxu0 %v977
    %1014 = vmatprep.subr.mxu0 0.0
    %1015 = vmatpush1.msra.mxu0 %v976
    %1016 = vmatprep.subr.mxu0 0.0
    %1017 = vmatpush1.msra.mxu0 %v975
    %1018 = vmatprep.subr.mxu0 0.0
    %1019 = vmatpush1.msra.mxu0 %v974
    %1020 = vmatprep.subr.mxu0 0.0
    %1021 = vmatpush2.msra.mxu0 0.0
    %1022 = vmatprep.subr.mxu0 0.0
    %1023 = vmatpush2.msra.mxu0 0.0
    %1024 = vmatprep.subr.mxu0 0.0
    %1025 = vmatpush2.msra.mxu0 0.0
    %1026 = vmatprep.subr.mxu0 0.0
    %1027 = vmatpush2.msra.mxu0 0.0
    %1028 = vmatprep.subr.mxu0 0.0
    %1029 = vmatpush2.msra.mxu0 0.0
    %1030 = vmatprep.subr.mxu0 0.0
    %1031 = vmatpush2.msra.mxu0 0.0
    %1032 = vmatprep.subr.mxu0 0.0
    %1033 = vmatpush2.msra.mxu0 0.0
    %1034 = vmatprep.subr.mxu0 0.0
    %1035 = vmatpush2.msra.mxu0 0.0
    %1036 = vmatprep.subr.mxu0 0.0
    %1037 = vmatpush2.msra.mxu0 0.0
    %1038 = vmatprep.subr.mxu0 0.0
    %1039 = vmatpush2.msra.mxu0 0.0
    %1040 = vmatprep.subr.mxu0 0.0
    %1041 = vmatpush2.msra.mxu0 0.0
    %1042 = vmatprep.subr.mxu0 0.0
    %1043 = vmatpush2.msra.mxu0 0.0
    %1044 = vmatprep.subr.mxu0 0.0
    %1045 = vmatpush2.msra.mxu0 0.0
    %1046 = vmatprep.subr.mxu0 0.0
    %1047 = vmatpush2.msra.mxu0 0.0
    %1048 = vmatprep.subr.mxu0 0.0
    %1049 = vmatpush2.msra.mxu0 0.0
    %1050 = vmatprep.subr.mxu0 0.0
    %1051 = vmatpush2.msra.mxu0 0.0
    %1052 = vmatprep.mubr.f32.mxu0 0.0
    %1053 = vmatmul.mubr.f32.gmra.mxu0 %v983
    %v1054 = vpop.f32.mrf.mxu0
    %v1055 = vadd.f32 %v981, %v1054
    %v1056 = vpop.f32.mrf.mxu0
    %1057 = vmatprep.mubr.f32.mxu0 0.0
    %1058 = vmatmul.mubr.f32.gmra.mxu0 %v986
    %v1059 = vpop.f32.mrf.mxu0
    %v1060 = vadd.f32 %v981, %v1059
    %v1061 = vpop.f32.mrf.mxu0
    %1062 = vdwg.mxu0
    %v1063 = vmul.f32 %v1055, 0.5
    %v1064 = vmul.f32 %v1060, 0.5
    %v1065 = vmul.f32 %v1055, 0.044715
    %v1066 = vmul.f32 %v1060, 0.044715
    %v1067 = vmul.f32 %v1065, %v1055
    %v1068 = vmul.f32 %v1066, %v1060
    %v1069 = vmul.f32 %v1067, %v1055
    %v1070 = vmul.f32 %v1068, %v1060
    %v1071 = vadd.f32 %v1055, %v1069
    %v1072 = vadd.f32 %v1060, %v1070
    %v1073 = vmul.f32 %v1071, 0.7978846
    %v1074 = vmul.f32 %v1072, 0.7978846
    %v1075 = vtanh.pop %v1073
    %v1076 = vtanh.pop %v1074
    %v1077 = vadd.f32 %v1075, 1.0
    %v1078 = vadd.f32 %v1076, 1.0
    %v1079 = vmul.f32 %v1063, %v1077
    %v1080 = vmul.f32 %v1064, %v1078
    %v1081 = vld [vmem:[%s6] sm:$0xff]
    %v1082 = vld [vmem:[%s6 + $0x8] sm:$0xff]
    %v1083 = vld [vmem:[%s6 + $0x10] sm:$0xff]
    %v1084 = vld [vmem:[%s6 + $0x18] sm:$0xff]
    %v1085 = vld [vmem:[%s6 + $0x20] sm:$0xff]
    %v1086 = vld [vmem:[%s6 + $0x28] sm:$0xff]
    %v1087 = vld [vmem:[%s6 + $0x30] sm:$0xff]
    %v1088 = vld [vmem:[%s6 + $0x38] sm:$0xff]
    %v1089 = vlaneseq
    %v1090 = vshrl.u32 %v1089, 7
    %v1091 = vsub.s32 5, %v1090
    %v1092 = vrot.slane %v69, %v1091
    %vm1093 = vcmask 523264
    %v1095 = vsel %vm1093, %v1079, 0
    %v1098 = vsel %vm1093, %v1080, 0
    %1100 = vmatprep.subr.mxu0 0.0
    %1101 = vmatpush1.msra.mxu0 0.0
    %1102 = vmatprep.subr.mxu0 0.0
    %1103 = vmatpush1.msra.mxu0 0.0
    %1104 = vmatprep.subr.mxu0 0.0
    %1105 = vmatpush1.msra.mxu0 0.0
    %1106 = vmatprep.subr.mxu0 0.0
    %1107 = vmatpush1.msra.mxu0 0.0
    %1108 = vmatprep.subr.mxu0 0.0
    %1109 = vmatpush1.msra.mxu0 0.0
    %1110 = vmatprep.subr.mxu0 0.0
    %1111 = vmatpush1.msra.mxu0 0.0
    %1112 = vmatprep.subr.mxu0 0.0
    %1113 = vmatpush1.msra.mxu0 0.0
    %1114 = vmatprep.subr.mxu0 0.0
    %1115 = vmatpush1.msra.mxu0 0.0
    %1116 = vmatprep.subr.mxu0 0.0
    %1117 = vmatpush1.msra.mxu0 %v1088
    %1118 = vmatprep.subr.mxu0 0.0
    %1119 = vmatpush1.msra.mxu0 %v1087
    %1120 = vmatprep.subr.mxu0 0.0
    %1121 = vmatpush1.msra.mxu0 %v1086
    %1122 = vmatprep.subr.mxu0 0.0
    %1123 = vmatpush1.msra.mxu0 %v1085
    %1124 = vmatprep.subr.mxu0 0.0
    %1125 = vmatpush1.msra.mxu0 %v1084
    %1126 = vmatprep.subr.mxu0 0.0
    %1127 = vmatpush1.msra.mxu0 %v1083
    %1128 = vmatprep.subr.mxu0 0.0
    %1129 = vmatpush1.msra.mxu0 %v1082
    %1130 = vmatprep.subr.mxu0 0.0
    %1131 = vmatpush1.msra.mxu0 %v1081
    %1132 = vmatprep.subr.mxu0 0.0
    %1133 = vmatpush2.msra.mxu0 0.0
    %1134 = vmatprep.subr.mxu0 0.0
    %1135 = vmatpush2.msra.mxu0 0.0
    %1136 = vmatprep.subr.mxu0 0.0
    %1137 = vmatpush2.msra.mxu0 0.0
    %1138 = vmatprep.subr.mxu0 0.0
    %1139 = vmatpush2.msra.mxu0 0.0
    %1140 = vmatprep.subr.mxu0 0.0
    %1141 = vmatpush2.msra.mxu0 0.0
    %1142 = vmatprep.subr.mxu0 0.0
    %1143 = vmatpush2.msra.mxu0 0.0
    %1144 = vmatprep.subr.mxu0 0.0
    %1145 = vmatpush2.msra.mxu0 0.0
    %1146 = vmatprep.subr.mxu0 0.0
    %1147 = vmatpush2.msra.mxu0 0.0
    %1148 = vmatprep.subr.mxu0 0.0
    %1149 = vmatpush2.msra.mxu0 0.0
    %1150 = vmatprep.subr.mxu0 0.0
    %1151 = vmatpush2.msra.mxu0 0.0
    %1152 = vmatprep.subr.mxu0 0.0
    %1153 = vmatpush2.msra.mxu0 0.0
    %1154 = vmatprep.subr.mxu0 0.0
    %1155 = vmatpush2.msra.mxu0 0.0
    %1156 = vmatprep.subr.mxu0 0.0
    %1157 = vmatpush2.msra.mxu0 0.0
    %1158 = vmatprep.subr.mxu0 0.0
    %1159 = vmatpush2.msra.mxu0 0.0
    %1160 = vmatprep.subr.mxu0 0.0
    %1161 = vmatpush2.msra.mxu0 0.0
    %1162 = vmatprep.subr.mxu0 0.0
    %1163 = vmatpush2.msra.mxu0 0.0
    %1164 = vmatprep.mubr.f32.mxu0 0.0
    %1165 = vmatmul.mubr.f32.gmra.mxu0 %v1095
    %v1166 = vpop.f32.mrf.mxu0
    %v1167 = vadd.f32 %v1092, %v1166
    %v1168 = vpop.f32.mrf.mxu0
    %1169 = vmatprep.mubr.f32.mxu0 0.0
    %1170 = vmatmul.mubr.f32.gmra.mxu0 %v1098
    %v1171 = vpop.f32.mrf.mxu0
    %v1172 = vadd.f32 %v1092, %v1171
    %v1173 = vpop.f32.mrf.mxu0
    %1174 = vdwg.mxu0
    %v1175 = vadd.f32 %v972, %v1167
    %v1176 = vadd.f32 %v973, %v1172
    %v1177 = vsel %vm78, %v1175, 0.0
    %1178 = vadd.xlane.f32.xlu0 %v1177
    %v1179 = vpop.xlane.xlu0 %1178
    %v1180 = vsel %vm78, %v1176, 0.0
    %1181 = vadd.xlane.f32.xlu0 %v1180
    %v1182 = vpop.xlane.xlu0 %1181
    %v1183 = vmul.f32 %v1179, %v941
    %v1184 = vmul.f32 %v1182, %v941
    %v1185 = vsub.f32 %v1175, %v1183
    %v1186 = vsub.f32 %v1176, %v1184
    %v1187 = vmul.f32 %v1185, %v1185
    %v1188 = vmul.f32 %v1186, %v1186
    %v1189 = vsel %vm78, %v1187, 0.0
    %1190 = vadd.xlane.f32.xlu0 %v1189
    %v1191 = vpop.xlane.xlu0 %1190
    %v1192 = vsel %vm78, %v1188, 0.0
    %1193 = vadd.xlane.f32.xlu0 %v1192
    %v1194 = vpop.xlane.xlu0 %1193
    %v1195 = vmul.f32 %v1191, %v941
    %v1196 = vmul.f32 %v1194, %v941
    %v1197 = vadd.f32 %v1195, 1e-05
    %v1198 = vadd.f32 %v1196, 1e-05
    %v1199 = vrsqrt.pop %v1197
    %v1200 = vrsqrt.pop %v1198
    %v1201 = vmul.f32 %v1185, %v1199
    %v1202 = vmul.f32 %v1186, %v1200
    %v1203 = vlaneseq
    %v1204 = vshrl.u32 %v1203, 7
    %v1205 = vsub.s32 6, %v1204
    %v1206 = vrot.slane %v69, %v1205
    %v1207 = vmul.f32 %v1201, %v1206
    %v1208 = vmul.f32 %v1202, %v1206
    %v1209 = vlaneseq
    %v1210 = vshrl.u32 %v1209, 7
    %v1211 = vsub.s32 7, %v1210
    %v1212 = vrot.slane %v69, %v1211
    %v1213 = vadd.f32 %v1207, %v1212
    %v1214 = vadd.f32 %v1208, %v1212
    %s1215 = scalar_lea.vmem %s7, 8
    %v1216 = vld [vmem:[%s1215] sm:$0xff]
    %s1217 = scalar_lea.vmem %s3, 32
    %v1218 = vld [vmem:[%s1217] sm:$0xff]
    %v1219 = vld [vmem:[%s1217 + $0x8] sm:$0xff]
    %v1220 = vld [vmem:[%s1217 + $0x10] sm:$0xff]
    %v1221 = vld [vmem:[%s1217 + $0x18] sm:$0xff]
    %v1222 = vlaneseq
    %v1223 = vshrl.u32 %v1222, 7
    %v1224 = vsub.s32 0, %v1223
    %v1225 = vrot.slane %v1216, %v1224
    %v1227 = vsel %vm78, %v1213, 0
    %v1230 = vsel %vm78, %v1214, 0
    %1232 = vmatprep.subr.mxu0 0.0
    %1233 = vmatpush1.msra.mxu0 0.0
    %1234 = vmatprep.subr.mxu0 0.0
    %1235 = vmatpush1.msra.mxu0 0.0
    %1236 = vmatprep.subr.mxu0 0.0
    %1237 = vmatpush1.msra.mxu0 0.0
    %1238 = vmatprep.subr.mxu0 0.0
    %1239 = vmatpush1.msra.mxu0 0.0
    %1240 = vmatprep.subr.mxu0 0.0
    %1241 = vmatpush1.msra.mxu0 0.0
    %1242 = vmatprep.subr.mxu0 0.0
    %1243 = vmatpush1.msra.mxu0 0.0
    %1244 = vmatprep.subr.mxu0 0.0
    %1245 = vmatpush1.msra.mxu0 0.0
    %1246 = vmatprep.subr.mxu0 0.0
    %1247 = vmatpush1.msra.mxu0 0.0
    %1248 = vmatprep.subr.mxu0 0.0
    %1249 = vmatpush1.msra.mxu0 0.0
    %1250 = vmatprep.subr.mxu0 0.0
    %1251 = vmatpush1.msra.mxu0 0.0
    %1252 = vmatprep.subr.mxu0 0.0
    %1253 = vmatpush1.msra.mxu0 0.0
    %1254 = vmatprep.subr.mxu0 0.0
    %1255 = vmatpush1.msra.mxu0 0.0
    %1256 = vmatprep.subr.mxu0 0.0
    %1257 = vmatpush1.msra.mxu0 %v1221
    %1258 = vmatprep.subr.mxu0 0.0
    %1259 = vmatpush1.msra.mxu0 %v1220
    %1260 = vmatprep.subr.mxu0 0.0
    %1261 = vmatpush1.msra.mxu0 %v1219
    %1262 = vmatprep.subr.mxu0 0.0
    %1263 = vmatpush1.msra.mxu0 %v1218
    %1264 = vmatprep.subr.mxu0 0.0
    %1265 = vmatpush2.msra.mxu0 0.0
    %1266 = vmatprep.subr.mxu0 0.0
    %1267 = vmatpush2.msra.mxu0 0.0
    %1268 = vmatprep.subr.mxu0 0.0
    %1269 = vmatpush2.msra.mxu0 0.0
    %1270 = vmatprep.subr.mxu0 0.0
    %1271 = vmatpush2.msra.mxu0 0.0
    %1272 = vmatprep.subr.mxu0 0.0
    %1273 = vmatpush2.msra.mxu0 0.0
    %1274 = vmatprep.subr.mxu0 0.0
    %1275 = vmatpush2.msra.mxu0 0.0
    %1276 = vmatprep.subr.mxu0 0.0
    %1277 = vmatpush2.msra.mxu0 0.0
    %1278 = vmatprep.subr.mxu0 0.0
    %1279 = vmatpush2.msra.mxu0 0.0
    %1280 = vmatprep.subr.mxu0 0.0
    %1281 = vmatpush2.msra.mxu0 0.0
    %1282 = vmatprep.subr.mxu0 0.0
    %1283 = vmatpush2.msra.mxu0 0.0
    %1284 = vmatprep.subr.mxu0 0.0
    %1285 = vmatpush2.msra.mxu0 0.0
    %1286 = vmatprep.subr.mxu0 0.0
    %1287 = vmatpush2.msra.mxu0 0.0
    %1288 = vmatprep.subr.mxu0 0.0
    %1289 = vmatpush2.msra.mxu0 0.0
    %1290 = vmatprep.subr.mxu0 0.0
    %1291 = vmatpush2.msra.mxu0 0.0
    %1292 = vmatprep.subr.mxu0 0.0
    %1293 = vmatpush2.msra.mxu0 0.0
    %1294 = vmatprep.subr.mxu0 0.0
    %1295 = vmatpush2.msra.mxu0 0.0
    %1296 = vmatprep.mubr.f32.mxu0 0.0
    %1297 = vmatmul.mubr.f32.gmra.mxu0 %v1227
    %v1298 = vpop.f32.mrf.mxu0
    %v1299 = vadd.f32 %v1225, %v1298
    %v1300 = vpop.f32.mrf.mxu0
    %1301 = vmatprep.mubr.f32.mxu0 0.0
    %1302 = vmatmul.mubr.f32.gmra.mxu0 %v1230
    %v1303 = vpop.f32.mrf.mxu0
    %v1304 = vadd.f32 %v1225, %v1303
    %v1305 = vpop.f32.mrf.mxu0
    %1306 = vdwg.mxu0
    %v1307 = vmul.f32 %v1299, 0.25
    %v1308 = vmul.f32 %v1304, 0.25
    %1310 = vrot.lane.b32.xlu0 %v1299, 96
    %v1311 = vpop.permute.xlu0 %1310
    %v1313 = vsel %vm175, %v1307, 0
    %v1315 = vsel %vm175, %v1311, 0
    %1317 = vmatprep.subr.mxu0 0.0
    %1318 = vmatpush1.xpose.msra.mxu0 0.0
    %1319 = vmatprep.subr.mxu0 0.0
    %1320 = vmatpush1.xpose.msra.mxu0 0.0
    %1321 = vmatprep.subr.mxu0 0.0
    %1322 = vmatpush1.xpose.msra.mxu0 0.0
    %1323 = vmatprep.subr.mxu0 0.0
    %1324 = vmatpush1.xpose.msra.mxu0 0.0
    %1325 = vmatprep.subr.mxu0 0.0
    %1326 = vmatpush1.xpose.msra.mxu0 0.0
    %1327 = vmatprep.subr.mxu0 0.0
    %1328 = vmatpush1.xpose.msra.mxu0 0.0
    %1329 = vmatprep.subr.mxu0 0.0
    %1330 = vmatpush1.xpose.msra.mxu0 0.0
    %1331 = vmatprep.subr.mxu0 0.0
    %1332 = vmatpush1.xpose.msra.mxu0 0.0
    %1333 = vmatprep.subr.mxu0 0.0
    %1334 = vmatpush1.xpose.msra.mxu0 0.0
    %1335 = vmatprep.subr.mxu0 0.0
    %1336 = vmatpush1.xpose.msra.mxu0 0.0
    %1337 = vmatprep.subr.mxu0 0.0
    %1338 = vmatpush1.xpose.msra.mxu0 0.0
    %1339 = vmatprep.subr.mxu0 0.0
    %1340 = vmatpush1.xpose.msra.mxu0 0.0
    %1341 = vmatprep.subr.mxu0 0.0
    %1342 = vmatpush1.xpose.msra.mxu0 0.0
    %1343 = vmatprep.subr.mxu0 0.0
    %1344 = vmatpush1.xpose.msra.mxu0 0.0
    %1345 = vmatprep.subr.mxu0 0.0
    %1346 = vmatpush1.xpose.msra.mxu0 0.0
    %1347 = vmatprep.subr.mxu0 0.0
    %1348 = vmatpush1.xpose.msra.mxu0 %v1315
    %1349 = vmatprep.subr.mxu0 0.0
    %1350 = vmatpush2.xpose.msra.mxu0 0.0
    %1351 = vmatprep.subr.mxu0 0.0
    %1352 = vmatpush2.xpose.msra.mxu0 0.0
    %1353 = vmatprep.subr.mxu0 0.0
    %1354 = vmatpush2.xpose.msra.mxu0 0.0
    %1355 = vmatprep.subr.mxu0 0.0
    %1356 = vmatpush2.xpose.msra.mxu0 0.0
    %1357 = vmatprep.subr.mxu0 0.0
    %1358 = vmatpush2.xpose.msra.mxu0 0.0
    %1359 = vmatprep.subr.mxu0 0.0
    %1360 = vmatpush2.xpose.msra.mxu0 0.0
    %1361 = vmatprep.subr.mxu0 0.0
    %1362 = vmatpush2.xpose.msra.mxu0 0.0
    %1363 = vmatprep.subr.mxu0 0.0
    %1364 = vmatpush2.xpose.msra.mxu0 0.0
    %1365 = vmatprep.subr.mxu0 0.0
    %1366 = vmatpush2.xpose.msra.mxu0 0.0
    %1367 = vmatprep.subr.mxu0 0.0
    %1368 = vmatpush2.xpose.msra.mxu0 0.0
    %1369 = vmatprep.subr.mxu0 0.0
    %1370 = vmatpush2.xpose.msra.mxu0 0.0
    %1371 = vmatprep.subr.mxu0 0.0
    %1372 = vmatpush2.xpose.msra.mxu0 0.0
    %1373 = vmatprep.subr.mxu0 0.0
    %1374 = vmatpush2.xpose.msra.mxu0 0.0
    %1375 = vmatprep.subr.mxu0 0.0
    %1376 = vmatpush2.xpose.msra.mxu0 0.0
    %1377 = vmatprep.subr.mxu0 0.0
    %1378 = vmatpush2.xpose.msra.mxu0 0.0
    %1379 = vmatprep.subr.mxu0 0.0
    %1380 = vmatpush2.xpose.msra.mxu0 0.0
    %1381 = vmatprep.mubr.f32.mxu0 0.0
    %1382 = vmatmul.mubr.f32.gmra.mxu0 %v1313
    %v1383 = vpop.f32.mrf.mxu0
    %v1384 = vadd.f32 %v165, %v1383
    %v1385 = vpop.f32.mrf.mxu0
    %1386 = vdwg.mxu0
    %1388 = vrot.lane.b32.xlu0 %v1304, 96
    %v1389 = vpop.permute.xlu0 %1388
    %v1391 = vsel %vm175, %v1308, 0
    %v1393 = vsel %vm175, %v1389, 0
    %1395 = vmatprep.subr.mxu0 0.0
    %1396 = vmatpush1.xpose.msra.mxu0 0.0
    %1397 = vmatprep.subr.mxu0 0.0
    %1398 = vmatpush1.xpose.msra.mxu0 0.0
    %1399 = vmatprep.subr.mxu0 0.0
    %1400 = vmatpush1.xpose.msra.mxu0 0.0
    %1401 = vmatprep.subr.mxu0 0.0
    %1402 = vmatpush1.xpose.msra.mxu0 0.0
    %1403 = vmatprep.subr.mxu0 0.0
    %1404 = vmatpush1.xpose.msra.mxu0 0.0
    %1405 = vmatprep.subr.mxu0 0.0
    %1406 = vmatpush1.xpose.msra.mxu0 0.0
    %1407 = vmatprep.subr.mxu0 0.0
    %1408 = vmatpush1.xpose.msra.mxu0 0.0
    %1409 = vmatprep.subr.mxu0 0.0
    %1410 = vmatpush1.xpose.msra.mxu0 0.0
    %1411 = vmatprep.subr.mxu0 0.0
    %1412 = vmatpush1.xpose.msra.mxu0 0.0
    %1413 = vmatprep.subr.mxu0 0.0
    %1414 = vmatpush1.xpose.msra.mxu0 0.0
    %1415 = vmatprep.subr.mxu0 0.0
    %1416 = vmatpush1.xpose.msra.mxu0 0.0
    %1417 = vmatprep.subr.mxu0 0.0
    %1418 = vmatpush1.xpose.msra.mxu0 0.0
    %1419 = vmatprep.subr.mxu0 0.0
    %1420 = vmatpush1.xpose.msra.mxu0 0.0
    %1421 = vmatprep.subr.mxu0 0.0
    %1422 = vmatpush1.xpose.msra.mxu0 0.0
    %1423 = vmatprep.subr.mxu0 0.0
    %1424 = vmatpush1.xpose.msra.mxu0 0.0
    %1425 = vmatprep.subr.mxu0 0.0
    %1426 = vmatpush1.xpose.msra.mxu0 %v1393
    %1427 = vmatprep.subr.mxu0 0.0
    %1428 = vmatpush2.xpose.msra.mxu0 0.0
    %1429 = vmatprep.subr.mxu0 0.0
    %1430 = vmatpush2.xpose.msra.mxu0 0.0
    %1431 = vmatprep.subr.mxu0 0.0
    %1432 = vmatpush2.xpose.msra.mxu0 0.0
    %1433 = vmatprep.subr.mxu0 0.0
    %1434 = vmatpush2.xpose.msra.mxu0 0.0
    %1435 = vmatprep.subr.mxu0 0.0
    %1436 = vmatpush2.xpose.msra.mxu0 0.0
    %1437 = vmatprep.subr.mxu0 0.0
    %1438 = vmatpush2.xpose.msra.mxu0 0.0
    %1439 = vmatprep.subr.mxu0 0.0
    %1440 = vmatpush2.xpose.msra.mxu0 0.0
    %1441 = vmatprep.subr.mxu0 0.0
    %1442 = vmatpush2.xpose.msra.mxu0 0.0
    %1443 = vmatprep.subr.mxu0 0.0
    %1444 = vmatpush2.xpose.msra.mxu0 0.0
    %1445 = vmatprep.subr.mxu0 0.0
    %1446 = vmatpush2.xpose.msra.mxu0 0.0
    %1447 = vmatprep.subr.mxu0 0.0
    %1448 = vmatpush2.xpose.msra.mxu0 0.0
    %1449 = vmatprep.subr.mxu0 0.0
    %1450 = vmatpush2.xpose.msra.mxu0 0.0
    %1451 = vmatprep.subr.mxu0 0.0
    %1452 = vmatpush2.xpose.msra.mxu0 0.0
    %1453 = vmatprep.subr.mxu0 0.0
    %1454 = vmatpush2.xpose.msra.mxu0 0.0
    %1455 = vmatprep.subr.mxu0 0.0
    %1456 = vmatpush2.xpose.msra.mxu0 0.0
    %1457 = vmatprep.subr.mxu0 0.0
    %1458 = vmatpush2.xpose.msra.mxu0 0.0
    %1459 = vmatprep.mubr.f32.mxu0 0.0
    %1460 = vmatmul.mubr.f32.gmra.mxu0 %v1391
    %v1461 = vpop.f32.mrf.mxu0
    %v1462 = vadd.f32 %v169, %v1461
    %v1463 = vpop.f32.mrf.mxu0
    %1464 = vdwg.mxu0
    %v1465 = vsel %vm329, %v1384, -inf
    %1466 = vmax.xlane.f32.xlu0 %v1465
    %v1467 = vpop.xlane.xlu0 %1466
    %v1468 = vsel %vm329, %v1462, -inf
    %1469 = vmax.xlane.f32.xlu0 %v1468
    %v1470 = vpop.xlane.xlu0 %1469
    %v1471 = vsub.f32 %v1384, %v1467
    %v1472 = vsub.f32 %v1462, %v1470
    %v1473 = vmul.f32 %v1471, 1.442695
    %v1474 = vpow.pop %v1473
    %v1475 = vmul.f32 %v1472, 1.442695
    %v1476 = vpow.pop %v1475
    %v1477 = vsel %vm329, %v1474, 0.0
    %1478 = vadd.xlane.f32.xlu0 %v1477
    %v1479 = vpop.xlane.xlu0 %1478
    %v1480 = vsel %vm329, %v1476, 0.0
    %1481 = vadd.xlane.f32.xlu0 %v1480
    %v1482 = vpop.xlane.xlu0 %1481
    %v1483 = vrcp.pop %v1479
    %v1484 = vrcp.pop %v1482
    %v1485 = vmul.f32 %v1474, %v1483
    %v1486 = vmul.f32 %v1476, %v1484
    %1487 = vrot.lane.b32.xlu0 %v1299, 64
    %v1488 = vpop.permute.xlu0 %1487
    %v1491 = vsel %vm329, %v1485, 0
    %1493 = vmatprep.subr.mxu0 0.0
    %1494 = vmatpush1.msra.mxu0 0.0
    %1495 = vmatprep.subr.mxu0 0.0
    %1496 = vmatpush1.msra.mxu0 0.0
    %1497 = vmatprep.subr.mxu0 0.0
    %1498 = vmatpush1.msra.mxu0 0.0
    %1499 = vmatprep.subr.mxu0 0.0
    %1500 = vmatpush1.msra.mxu0 0.0
    %1501 = vmatprep.subr.mxu0 0.0
    %1502 = vmatpush1.msra.mxu0 0.0
    %1503 = vmatprep.subr.mxu0 0.0
    %1504 = vmatpush1.msra.mxu0 0.0
    %1505 = vmatprep.subr.mxu0 0.0
    %1506 = vmatpush1.msra.mxu0 0.0
    %1507 = vmatprep.subr.mxu0 0.0
    %1508 = vmatpush1.msra.mxu0 0.0
    %1509 = vmatprep.subr.mxu0 0.0
    %1510 = vmatpush1.msra.mxu0 0.0
    %1511 = vmatprep.subr.mxu0 0.0
    %1512 = vmatpush1.msra.mxu0 0.0
    %1513 = vmatprep.subr.mxu0 0.0
    %1514 = vmatpush1.msra.mxu0 0.0
    %1515 = vmatprep.subr.mxu0 0.0
    %1516 = vmatpush1.msra.mxu0 0.0
    %1517 = vmatprep.subr.mxu0 0.0
    %1518 = vmatpush1.msra.mxu0 0.0
    %1519 = vmatprep.subr.mxu0 0.0
    %1520 = vmatpush1.msra.mxu0 0.0
    %1521 = vmatprep.subr.mxu0 0.0
    %1522 = vmatpush1.msra.mxu0 0.0
    %1523 = vmatprep.subr.mxu0 0.0
    %1524 = vmatpush1.msra.mxu0 %v1488
    %1525 = vmatprep.subr.mxu0 0.0
    %1526 = vmatpush2.msra.mxu0 0.0
    %1527 = vmatprep.subr.mxu0 0.0
    %1528 = vmatpush2.msra.mxu0 0.0
    %1529 = vmatprep.subr.mxu0 0.0
    %1530 = vmatpush2.msra.mxu0 0.0
    %1531 = vmatprep.subr.mxu0 0.0
    %1532 = vmatpush2.msra.mxu0 0.0
    %1533 = vmatprep.subr.mxu0 0.0
    %1534 = vmatpush2.msra.mxu0 0.0
    %1535 = vmatprep.subr.mxu0 0.0
    %1536 = vmatpush2.msra.mxu0 0.0
    %1537 = vmatprep.subr.mxu0 0.0
    %1538 = vmatpush2.msra.mxu0 0.0
    %1539 = vmatprep.subr.mxu0 0.0
    %1540 = vmatpush2.msra.mxu0 0.0
    %1541 = vmatprep.subr.mxu0 0.0
    %1542 = vmatpush2.msra.mxu0 0.0
    %1543 = vmatprep.subr.mxu0 0.0
    %1544 = vmatpush2.msra.mxu0 0.0
    %1545 = vmatprep.subr.mxu0 0.0
    %1546 = vmatpush2.msra.mxu0 0.0
    %1547 = vmatprep.subr.mxu0 0.0
    %1548 = vmatpush2.msra.mxu0 0.0
    %1549 = vmatprep.subr.mxu0 0.0
    %1550 = vmatpush2.msra.mxu0 0.0
    %1551 = vmatprep.subr.mxu0 0.0
    %1552 = vmatpush2.msra.mxu0 0.0
    %1553 = vmatprep.subr.mxu0 0.0
    %1554 = vmatpush2.msra.mxu0 0.0
    %1555 = vmatprep.subr.mxu0 0.0
    %1556 = vmatpush2.msra.mxu0 0.0
    %1557 = vmatprep.mubr.f32.mxu0 0.0
    %1558 = vmatmul.mubr.f32.gmra.mxu0 %v1491
    %v1559 = vpop.f32.mrf.mxu0
    %v1560 = vadd.f32 0.0, %v1559
    %v1561 = vpop.f32.mrf.mxu0
    %1562 = vdwg.mxu0
    %1563 = vrot.lane.b32.xlu0 %v1304, 64
    %v1564 = vpop.permute.xlu0 %1563
    %v1567 = vsel %vm329, %v1486, 0
    %1569 = vmatprep.subr.mxu0 0.0
    %1570 = vmatpush1.msra.mxu0 0.0
    %1571 = vmatprep.subr.mxu0 0.0
    %1572 = vmatpush1.msra.mxu0 0.0
    %1573 = vmatprep.subr.mxu0 0.0
    %1574 = vmatpush1.msra.mxu0 0.0
    %1575 = vmatprep.subr.mxu0 0.0
    %1576 = vmatpush1.msra.mxu0 0.0
    %1577 = vmatprep.subr.mxu0 0.0
    %1578 = vmatpush1.msra.mxu0 0.0
    %1579 = vmatprep.subr.mxu0 0.0
    %1580 = vmatpush1.msra.mxu0 0.0
    %1581 = vmatprep.subr.mxu0 0.0
    %1582 = vmatpush1.msra.mxu0 0.0
    %1583 = vmatprep.subr.mxu0 0.0
    %1584 = vmatpush1.msra.mxu0 0.0
    %1585 = vmatprep.subr.mxu0 0.0
    %1586 = vmatpush1.msra.mxu0 0.0
    %1587 = vmatprep.subr.mxu0 0.0
    %1588 = vmatpush1.msra.mxu0 0.0
    %1589 = vmatprep.subr.mxu0 0.0
    %1590 = vmatpush1.msra.mxu0 0.0
    %1591 = vmatprep.subr.mxu0 0.0
    %1592 = vmatpush1.msra.mxu0 0.0
    %1593 = vmatprep.subr.mxu0 0.0
    %1594 = vmatpush1.msra.mxu0 0.0
    %1595 = vmatprep.subr.mxu0 0.0
    %1596 = vmatpush1.msra.mxu0 0.0
    %1597 = vmatprep.subr.mxu0 0.0
    %1598 = vmatpush1.msra.mxu0 0.0
    %1599 = vmatprep.subr.mxu0 0.0
    %1600 = vmatpush1.msra.mxu0 %v1564
    %1601 = vmatprep.subr.mxu0 0.0
    %1602 = vmatpush2.msra.mxu0 0.0
    %1603 = vmatprep.subr.mxu0 0.0
    %1604 = vmatpush2.msra.mxu0 0.0
    %1605 = vmatprep.subr.mxu0 0.0
    %1606 = vmatpush2.msra.mxu0 0.0
    %1607 = vmatprep.subr.mxu0 0.0
    %1608 = vmatpush2.msra.mxu0 0.0
    %1609 = vmatprep.subr.mxu0 0.0
    %1610 = vmatpush2.msra.mxu0 0.0
    %1611 = vmatprep.subr.mxu0 0.0
    %1612 = vmatpush2.msra.mxu0 0.0
    %1613 = vmatprep.subr.mxu0 0.0
    %1614 = vmatpush2.msra.mxu0 0.0
    %1615 = vmatprep.subr.mxu0 0.0
    %1616 = vmatpush2.msra.mxu0 0.0
    %1617 = vmatprep.subr.mxu0 0.0
    %1618 = vmatpush2.msra.mxu0 0.0
    %1619 = vmatprep.subr.mxu0 0.0
    %1620 = vmatpush2.msra.mxu0 0.0
    %1621 = vmatprep.subr.mxu0 0.0
    %1622 = vmatpush2.msra.mxu0 0.0
    %1623 = vmatprep.subr.mxu0 0.0
    %1624 = vmatpush2.msra.mxu0 0.0
    %1625 = vmatprep.subr.mxu0 0.0
    %1626 = vmatpush2.msra.mxu0 0.0
    %1627 = vmatprep.subr.mxu0 0.0
    %1628 = vmatpush2.msra.mxu0 0.0
    %1629 = vmatprep.subr.mxu0 0.0
    %1630 = vmatpush2.msra.mxu0 0.0
    %1631 = vmatprep.subr.mxu0 0.0
    %1632 = vmatpush2.msra.mxu0 0.0
    %1633 = vmatprep.mubr.f32.mxu0 0.0
    %1634 = vmatmul.mubr.f32.gmra.mxu0 %v1567
    %v1635 = vpop.f32.mrf.mxu0
    %v1636 = vadd.f32 0.0, %v1635
    %v1637 = vpop.f32.mrf.mxu0
    %1638 = vdwg.mxu0
    %1639 = vrot.lane.b32.xlu0 %v1307, 112
    %v1640 = vpop.permute.xlu0 %1639
    %1641 = vrot.lane.b32.xlu0 %v1299, 80
    %v1642 = vpop.permute.xlu0 %1641
    %v1643 = vsel %vm175, %v1640, 0
    %v1645 = vsel %vm175, %v1642, 0
    %1647 = vmatprep.subr.mxu0 0.0
    %1648 = vmatpush1.xpose.msra.mxu0 0.0
    %1649 = vmatprep.subr.mxu0 0.0
    %1650 = vmatpush1.xpose.msra.mxu0 0.0
    %1651 = vmatprep.subr.mxu0 0.0
    %1652 = vmatpush1.xpose.msra.mxu0 0.0
    %1653 = vmatprep.subr.mxu0 0.0
    %1654 = vmatpush1.xpose.msra.mxu0 0.0
    %1655 = vmatprep.subr.mxu0 0.0
    %1656 = vmatpush1.xpose.msra.mxu0 0.0
    %1657 = vmatprep.subr.mxu0 0.0
    %1658 = vmatpush1.xpose.msra.mxu0 0.0
    %1659 = vmatprep.subr.mxu0 0.0
    %1660 = vmatpush1.xpose.msra.mxu0 0.0
    %1661 = vmatprep.subr.mxu0 0.0
    %1662 = vmatpush1.xpose.msra.mxu0 0.0
    %1663 = vmatprep.subr.mxu0 0.0
    %1664 = vmatpush1.xpose.msra.mxu0 0.0
    %1665 = vmatprep.subr.mxu0 0.0
    %1666 = vmatpush1.xpose.msra.mxu0 0.0
    %1667 = vmatprep.subr.mxu0 0.0
    %1668 = vmatpush1.xpose.msra.mxu0 0.0
    %1669 = vmatprep.subr.mxu0 0.0
    %1670 = vmatpush1.xpose.msra.mxu0 0.0
    %1671 = vmatprep.subr.mxu0 0.0
    %1672 = vmatpush1.xpose.msra.mxu0 0.0
    %1673 = vmatprep.subr.mxu0 0.0
    %1674 = vmatpush1.xpose.msra.mxu0 0.0
    %1675 = vmatprep.subr.mxu0 0.0
    %1676 = vmatpush1.xpose.msra.mxu0 0.0
    %1677 = vmatprep.subr.mxu0 0.0
    %1678 = vmatpush1.xpose.msra.mxu0 %v1645
    %1679 = vmatprep.subr.mxu0 0.0
    %1680 = vmatpush2.xpose.msra.mxu0 0.0
    %1681 = vmatprep.subr.mxu0 0.0
    %1682 = vmatpush2.xpose.msra.mxu0 0.0
    %1683 = vmatprep.subr.mxu0 0.0
    %1684 = vmatpush2.xpose.msra.mxu0 0.0
    %1685 = vmatprep.subr.mxu0 0.0
    %1686 = vmatpush2.xpose.msra.mxu0 0.0
    %1687 = vmatprep.subr.mxu0 0.0
    %1688 = vmatpush2.xpose.msra.mxu0 0.0
    %1689 = vmatprep.subr.mxu0 0.0
    %1690 = vmatpush2.xpose.msra.mxu0 0.0
    %1691 = vmatprep.subr.mxu0 0.0
    %1692 = vmatpush2.xpose.msra.mxu0 0.0
    %1693 = vmatprep.subr.mxu0 0.0
    %1694 = vmatpush2.xpose.msra.mxu0 0.0
    %1695 = vmatprep.subr.mxu0 0.0
    %1696 = vmatpush2.xpose.msra.mxu0 0.0
    %1697 = vmatprep.subr.mxu0 0.0
    %1698 = vmatpush2.xpose.msra.mxu0 0.0
    %1699 = vmatprep.subr.mxu0 0.0
    %1700 = vmatpush2.xpose.msra.mxu0 0.0
    %1701 = vmatprep.subr.mxu0 0.0
    %1702 = vmatpush2.xpose.msra.mxu0 0.0
    %1703 = vmatprep.subr.mxu0 0.0
    %1704 = vmatpush2.xpose.msra.mxu0 0.0
    %1705 = vmatprep.subr.mxu0 0.0
    %1706 = vmatpush2.xpose.msra.mxu0 0.0
    %1707 = vmatprep.subr.mxu0 0.0
    %1708 = vmatpush2.xpose.msra.mxu0 0.0
    %1709 = vmatprep.subr.mxu0 0.0
    %1710 = vmatpush2.xpose.msra.mxu0 0.0
    %1711 = vmatprep.mubr.f32.mxu0 0.0
    %1712 = vmatmul.mubr.f32.gmra.mxu0 %v1643
    %v1713 = vpop.f32.mrf.mxu0
    %v1714 = vadd.f32 %v165, %v1713
    %v1715 = vpop.f32.mrf.mxu0
    %1716 = vdwg.mxu0
    %1717 = vrot.lane.b32.xlu0 %v1308, 112
    %v1718 = vpop.permute.xlu0 %1717
    %1719 = vrot.lane.b32.xlu0 %v1304, 80
    %v1720 = vpop.permute.xlu0 %1719
    %v1721 = vsel %vm175, %v1718, 0
    %v1723 = vsel %vm175, %v1720, 0
    %1725 = vmatprep.subr.mxu0 0.0
    %1726 = vmatpush1.xpose.msra.mxu0 0.0
    %1727 = vmatprep.subr.mxu0 0.0
    %1728 = vmatpush1.xpose.msra.mxu0 0.0
    %1729 = vmatprep.subr.mxu0 0.0
    %1730 = vmatpush1.xpose.msra.mxu0 0.0
    %1731 = vmatprep.subr.mxu0 0.0
    %1732 = vmatpush1.xpose.msra.mxu0 0.0
    %1733 = vmatprep.subr.mxu0 0.0
    %1734 = vmatpush1.xpose.msra.mxu0 0.0
    %1735 = vmatprep.subr.mxu0 0.0
    %1736 = vmatpush1.xpose.msra.mxu0 0.0
    %1737 = vmatprep.subr.mxu0 0.0
    %1738 = vmatpush1.xpose.msra.mxu0 0.0
    %1739 = vmatprep.subr.mxu0 0.0
    %1740 = vmatpush1.xpose.msra.mxu0 0.0
    %1741 = vmatprep.subr.mxu0 0.0
    %1742 = vmatpush1.xpose.msra.mxu0 0.0
    %1743 = vmatprep.subr.mxu0 0.0
    %1744 = vmatpush1.xpose.msra.mxu0 0.0
    %1745 = vmatprep.subr.mxu0 0.0
    %1746 = vmatpush1.xpose.msra.mxu0 0.0
    %1747 = vmatprep.subr.mxu0 0.0
    %1748 = vmatpush1.xpose.msra.mxu0 0.0
    %1749 = vmatprep.subr.mxu0 0.0
    %1750 = vmatpush1.xpose.msra.mxu0 0.0
    %1751 = vmatprep.subr.mxu0 0.0
    %1752 = vmatpush1.xpose.msra.mxu0 0.0
    %1753 = vmatprep.subr.mxu0 0.0
    %1754 = vmatpush1.xpose.msra.mxu0 0.0
    %1755 = vmatprep.subr.mxu0 0.0
    %1756 = vmatpush1.xpose.msra.mxu0 %v1723
    %1757 = vmatprep.subr.mxu0 0.0
    %1758 = vmatpush2.xpose.msra.mxu0 0.0
    %1759 = vmatprep.subr.mxu0 0.0
    %1760 = vmatpush2.xpose.msra.mxu0 0.0
    %1761 = vmatprep.subr.mxu0 0.0
    %1762 = vmatpush2.xpose.msra.mxu0 0.0
    %1763 = vmatprep.subr.mxu0 0.0
    %1764 = vmatpush2.xpose.msra.mxu0 0.0
    %1765 = vmatprep.subr.mxu0 0.0
    %1766 = vmatpush2.xpose.msra.mxu0 0.0
    %1767 = vmatprep.subr.mxu0 0.0
    %1768 = vmatpush2.xpose.msra.mxu0 0.0
    %1769 = vmatprep.subr.mxu0 0.0
    %1770 = vmatpush2.xpose.msra.mxu0 0.0
    %1771 = vmatprep.subr.mxu0 0.0
    %1772 = vmatpush2.xpose.msra.mxu0 0.0
    %1773 = vmatprep.subr.mxu0 0.0
    %1774 = vmatpush2.xpose.msra.mxu0 0.0
    %1775 = vmatprep.subr.mxu0 0.0
    %1776 = vmatpush2.xpose.msra.mxu0 0.0
    %1777 = vmatprep.subr.mxu0 0.0
    %1778 = vmatpush2.xpose.msra.mxu0 0.0
    %1779 = vmatprep.subr.mxu0 0.0
    %1780 = vmatpush2.xpose.msra.mxu0 0.0
    %1781 = vmatprep.subr.mxu0 0.0
    %1782 = vmatpush2.xpose.msra.mxu0 0.0
    %1783 = vmatprep.subr.mxu0 0.0
    %1784 = vmatpush2.xpose.msra.mxu0 0.0
    %1785 = vmatprep.subr.mxu0 0.0
    %1786 = vmatpush2.xpose.msra.mxu0 0.0
    %1787 = vmatprep.subr.mxu0 0.0
    %1788 = vmatpush2.xpose.msra.mxu0 0.0
    %1789 = vmatprep.mubr.f32.mxu0 0.0
    %1790 = vmatmul.mubr.f32.gmra.mxu0 %v1721
    %v1791 = vpop.f32.mrf.mxu0
    %v1792 = vadd.f32 %v169, %v1791
    %v1793 = vpop.f32.mrf.mxu0
    %1794 = vdwg.mxu0
    %v1795 = vsel %vm329, %v1714, -inf
    %1796 = vmax.xlane.f32.xlu0 %v1795
    %v1797 = vpop.xlane.xlu0 %1796
    %v1798 = vsel %vm329, %v1792, -inf
    %1799 = vmax.xlane.f32.xlu0 %v1798
    %v1800 = vpop.xlane.xlu0 %1799
    %v1801 = vsub.f32 %v1714, %v1797
    %v1802 = vsub.f32 %v1792, %v1800
    %v1803 = vmul.f32 %v1801, 1.442695
    %v1804 = vpow.pop %v1803
    %v1805 = vmul.f32 %v1802, 1.442695
    %v1806 = vpow.pop %v1805
    %v1807 = vsel %vm329, %v1804, 0.0
    %1808 = vadd.xlane.f32.xlu0 %v1807
    %v1809 = vpop.xlane.xlu0 %1808
    %v1810 = vsel %vm329, %v1806, 0.0
    %1811 = vadd.xlane.f32.xlu0 %v1810
    %v1812 = vpop.xlane.xlu0 %1811
    %v1813 = vrcp.pop %v1809
    %v1814 = vrcp.pop %v1812
    %v1815 = vmul.f32 %v1804, %v1813
    %v1816 = vmul.f32 %v1806, %v1814
    %1817 = vrot.lane.b32.xlu0 %v1299, 48
    %v1818 = vpop.permute.xlu0 %1817
    %v1821 = vsel %vm329, %v1815, 0
    %1823 = vmatprep.subr.mxu0 0.0
    %1824 = vmatpush1.msra.mxu0 0.0
    %1825 = vmatprep.subr.mxu0 0.0
    %1826 = vmatpush1.msra.mxu0 0.0
    %1827 = vmatprep.subr.mxu0 0.0
    %1828 = vmatpush1.msra.mxu0 0.0
    %1829 = vmatprep.subr.mxu0 0.0
    %1830 = vmatpush1.msra.mxu0 0.0
    %1831 = vmatprep.subr.mxu0 0.0
    %1832 = vmatpush1.msra.mxu0 0.0
    %1833 = vmatprep.subr.mxu0 0.0
    %1834 = vmatpush1.msra.mxu0 0.0
    %1835 = vmatprep.subr.mxu0 0.0
    %1836 = vmatpush1.msra.mxu0 0.0
    %1837 = vmatprep.subr.mxu0 0.0
    %1838 = vmatpush1.msra.mxu0 0.0
    %1839 = vmatprep.subr.mxu0 0.0
    %1840 = vmatpush1.msra.mxu0 0.0
    %1841 = vmatprep.subr.mxu0 0.0
    %1842 = vmatpush1.msra.mxu0 0.0
    %1843 = vmatprep.subr.mxu0 0.0
    %1844 = vmatpush1.msra.mxu0 0.0
    %1845 = vmatprep.subr.mxu0 0.0
    %1846 = vmatpush1.msra.mxu0 0.0
    %1847 = vmatprep.subr.mxu0 0.0
    %1848 = vmatpush1.msra.mxu0 0.0
    %1849 = vmatprep.subr.mxu0 0.0
    %1850 = vmatpush1.msra.mxu0 0.0
    %1851 = vmatprep.subr.mxu0 0.0
    %1852 = vmatpush1.msra.mxu0 0.0
    %1853 = vmatprep.subr.mxu0 0.0
    %1854 = vmatpush1.msra.mxu0 %v1818
    %1855 = vmatprep.subr.mxu0 0.0
    %1856 = vmatpush2.msra.mxu0 0.0
    %1857 = vmatprep.subr.mxu0 0.0
    %1858 = vmatpush2.msra.mxu0 0.0
    %1859 = vmatprep.subr.mxu0 0.0
    %1860 = vmatpush2.msra.mxu0 0.0
    %1861 = vmatprep.subr.mxu0 0.0
    %1862 = vmatpush2.msra.mxu0 0.0
    %1863 = vmatprep.subr.mxu0 0.0
    %1864 = vmatpush2.msra.mxu0 0.0
    %1865 = vmatprep.subr.mxu0 0.0
    %1866 = vmatpush2.msra.mxu0 0.0
    %1867 = vmatprep.subr.mxu0 0.0
    %1868 = vmatpush2.msra.mxu0 0.0
    %1869 = vmatprep.subr.mxu0 0.0
    %1870 = vmatpush2.msra.mxu0 0.0
    %1871 = vmatprep.subr.mxu0 0.0
    %1872 = vmatpush2.msra.mxu0 0.0
    %1873 = vmatprep.subr.mxu0 0.0
    %1874 = vmatpush2.msra.mxu0 0.0
    %1875 = vmatprep.subr.mxu0 0.0
    %1876 = vmatpush2.msra.mxu0 0.0
    %1877 = vmatprep.subr.mxu0 0.0
    %1878 = vmatpush2.msra.mxu0 0.0
    %1879 = vmatprep.subr.mxu0 0.0
    %1880 = vmatpush2.msra.mxu0 0.0
    %1881 = vmatprep.subr.mxu0 0.0
    %1882 = vmatpush2.msra.mxu0 0.0
    %1883 = vmatprep.subr.mxu0 0.0
    %1884 = vmatpush2.msra.mxu0 0.0
    %1885 = vmatprep.subr.mxu0 0.0
    %1886 = vmatpush2.msra.mxu0 0.0
    %1887 = vmatprep.mubr.f32.mxu0 0.0
    %1888 = vmatmul.mubr.f32.gmra.mxu0 %v1821
    %v1889 = vpop.f32.mrf.mxu0
    %v1890 = vadd.f32 0.0, %v1889
    %v1891 = vpop.f32.mrf.mxu0
    %1892 = vdwg.mxu0
    %1893 = vrot.lane.b32.xlu0 %v1304, 48
    %v1894 = vpop.permute.xlu0 %1893
    %v1897 = vsel %vm329, %v1816, 0
    %1899 = vmatprep.subr.mxu0 0.0
    %1900 = vmatpush1.msra.mxu0 0.0
    %1901 = vmatprep.subr.mxu0 0.0
    %1902 = vmatpush1.msra.mxu0 0.0
    %1903 = vmatprep.subr.mxu0 0.0
    %1904 = vmatpush1.msra.mxu0 0.0
    %1905 = vmatprep.subr.mxu0 0.0
    %1906 = vmatpush1.msra.mxu0 0.0
    %1907 = vmatprep.subr.mxu0 0.0
    %1908 = vmatpush1.msra.mxu0 0.0
    %1909 = vmatprep.subr.mxu0 0.0
    %1910 = vmatpush1.msra.mxu0 0.0
    %1911 = vmatprep.subr.mxu0 0.0
    %1912 = vmatpush1.msra.mxu0 0.0
    %1913 = vmatprep.subr.mxu0 0.0
    %1914 = vmatpush1.msra.mxu0 0.0
    %1915 = vmatprep.subr.mxu0 0.0
    %1916 = vmatpush1.msra.mxu0 0.0
    %1917 = vmatprep.subr.mxu0 0.0
    %1918 = vmatpush1.msra.mxu0 0.0
    %1919 = vmatprep.subr.mxu0 0.0
    %1920 = vmatpush1.msra.mxu0 0.0
    %1921 = vmatprep.subr.mxu0 0.0
    %1922 = vmatpush1.msra.mxu0 0.0
    %1923 = vmatprep.subr.mxu0 0.0
    %1924 = vmatpush1.msra.mxu0 0.0
    %1925 = vmatprep.subr.mxu0 0.0
    %1926 = vmatpush1.msra.mxu0 0.0
    %1927 = vmatprep.subr.mxu0 0.0
    %1928 = vmatpush1.msra.mxu0 0.0
    %1929 = vmatprep.subr.mxu0 0.0
    %1930 = vmatpush1.msra.mxu0 %v1894
    %1931 = vmatprep.subr.mxu0 0.0
    %1932 = vmatpush2.msra.mxu0 0.0
    %1933 = vmatprep.subr.mxu0 0.0
    %1934 = vmatpush2.msra.mxu0 0.0
    %1935 = vmatprep.subr.mxu0 0.0
    %1936 = vmatpush2.msra.mxu0 0.0
    %1937 = vmatprep.subr.mxu0 0.0
    %1938 = vmatpush2.msra.mxu0 0.0
    %1939 = vmatprep.subr.mxu0 0.0
    %1940 = vmatpush2.msra.mxu0 0.0
    %1941 = vmatprep.subr.mxu0 0.0
    %1942 = vmatpush2.msra.mxu0 0.0
    %1943 = vmatprep.subr.mxu0 0.0
    %1944 = vmatpush2.msra.mxu0 0.0
    %1945 = vmatprep.subr.mxu0 0.0
    %1946 = vmatpush2.msra.mxu0 0.0
    %1947 = vmatprep.subr.mxu0 0.0
    %1948 = vmatpush2.msra.mxu0 0.0
    %1949 = vmatprep.subr.mxu0 0.0
    %1950 = vmatpush2.msra.mxu0 0.0
    %1951 = vmatprep.subr.mxu0 0.0
    %1952 = vmatpush2.msra.mxu0 0.0
    %1953 = vmatprep.subr.mxu0 0.0
    %1954 = vmatpush2.msra.mxu0 0.0
    %1955 = vmatprep.subr.mxu0 0.0
    %1956 = vmatpush2.msra.mxu0 0.0
    %1957 = vmatprep.subr.mxu0 0.0
    %1958 = vmatpush2.msra.mxu0 0.0
    %1959 = vmatprep.subr.mxu0 0.0
    %1960 = vmatpush2.msra.mxu0 0.0
    %1961 = vmatprep.subr.mxu0 0.0
    %1962 = vmatpush2.msra.mxu0 0.0
    %1963 = vmatprep.mubr.f32.mxu0 0.0
    %1964 = vmatmul.mubr.f32.gmra.mxu0 %v1897
    %v1965 = vpop.f32.mrf.mxu0
    %v1966 = vadd.f32 0.0, %v1965
    %v1967 = vpop.f32.mrf.mxu0
    %1968 = vdwg.mxu0
    %1971 = vrot.lane.b32.xlu0 %v1890, 16
    %v1972 = vpop.permute.xlu0 %1971
    %1973 = vrot.lane.b32.xlu0 %v1966, 16
    %v1974 = vpop.permute.xlu0 %1973
    %v1977 = vsel %vm175, %v1560, %v1972
    %v1978 = vsel %vm175, %v1636, %v1974
    %s1979 = scalar_lea.vmem %s4, 32
    %v1980 = vld [vmem:[%s1979] sm:$0xff]
    %v1981 = vld [vmem:[%s1979 + $0x8] sm:$0xff]
    %v1982 = vld [vmem:[%s1979 + $0x10] sm:$0xff]
    %v1983 = vld [vmem:[%s1979 + $0x18] sm:$0xff]
    %v1984 = vlaneseq
    %v1985 = vshrl.u32 %v1984, 7
    %v1986 = vsub.s32 1, %v1985
    %v1987 = vrot.slane %v1216, %v1986
    %v1989 = vsel %vm78, %v1977, 0
    %v1992 = vsel %vm78, %v1978, 0
    %1994 = vmatprep.subr.mxu0 0.0
    %1995 = vmatpush1.msra.mxu0 0.0
    %1996 = vmatprep.subr.mxu0 0.0
    %1997 = vmatpush1.msra.mxu0 0.0
    %1998 = vmatprep.subr.mxu0 0.0
    %1999 = vmatpush1.msra.mxu0 0.0
    %2000 = vmatprep.subr.mxu0 0.0
    %2001 = vmatpush1.msra.mxu0 0.0
    %2002 = vmatprep.subr.mxu0 0.0
    %2003 = vmatpush1.msra.mxu0 0.0
    %2004 = vmatprep.subr.mxu0 0.0
    %2005 = vmatpush1.msra.mxu0 0.0
    %2006 = vmatprep.subr.mxu0 0.0
    %2007 = vmatpush1.msra.mxu0 0.0
    %2008 = vmatprep.subr.mxu0 0.0
    %2009 = vmatpush1.msra.mxu0 0.0
    %2010 = vmatprep.subr.mxu0 0.0
    %2011 = vmatpush1.msra.mxu0 0.0
    %2012 = vmatprep.subr.mxu0 0.0
    %2013 = vmatpush1.msra.mxu0 0.0
    %2014 = vmatprep.subr.mxu0 0.0
    %2015 = vmatpush1.msra.mxu0 0.0
    %2016 = vmatprep.subr.mxu0 0.0
    %2017 = vmatpush1.msra.mxu0 0.0
    %2018 = vmatprep.subr.mxu0 0.0
    %2019 = vmatpush1.msra.mxu0 %v1983
    %2020 = vmatprep.subr.mxu0 0.0
    %2021 = vmatpush1.msra.mxu0 %v1982
    %2022 = vmatprep.subr.mxu0 0.0
    %2023 = vmatpush1.msra.mxu0 %v1981
    %2024 = vmatprep.subr.mxu0 0.0
    %2025 = vmatpush1.msra.mxu0 %v1980
    %2026 = vmatprep.subr.mxu0 0.0
    %2027 = vmatpush2.msra.mxu0 0.0
    %2028 = vmatprep.subr.mxu0 0.0
    %2029 = vmatpush2.msra.mxu0 0.0
    %2030 = vmatprep.subr.mxu0 0.0
    %2031 = vmatpush2.msra.mxu0 0.0
    %2032 = vmatprep.subr.mxu0 0.0
    %2033 = vmatpush2.msra.mxu0 0.0
    %2034 = vmatprep.subr.mxu0 0.0
    %2035 = vmatpush2.msra.mxu0 0.0
    %2036 = vmatprep.subr.mxu0 0.0
    %2037 = vmatpush2.msra.mxu0 0.0
    %2038 = vmatprep.subr.mxu0 0.0
    %2039 = vmatpush2.msra.mxu0 0.0
    %2040 = vmatprep.subr.mxu0 0.0
    %2041 = vmatpush2.msra.mxu0 0.0
    %2042 = vmatprep.subr.mxu0 0.0
    %2043 = vmatpush2.msra.mxu0 0.0
    %2044 = vmatprep.subr.mxu0 0.0
    %2045 = vmatpush2.msra.mxu0 0.0
    %2046 = vmatprep.subr.mxu0 0.0
    %2047 = vmatpush2.msra.mxu0 0.0
    %2048 = vmatprep.subr.mxu0 0.0
    %2049 = vmatpush2.msra.mxu0 0.0
    %2050 = vmatprep.subr.mxu0 0.0
    %2051 = vmatpush2.msra.mxu0 0.0
    %2052 = vmatprep.subr.mxu0 0.0
    %2053 = vmatpush2.msra.mxu0 0.0
    %2054 = vmatprep.subr.mxu0 0.0
    %2055 = vmatpush2.msra.mxu0 0.0
    %2056 = vmatprep.subr.mxu0 0.0
    %2057 = vmatpush2.msra.mxu0 0.0
    %2058 = vmatprep.mubr.f32.mxu0 0.0
    %2059 = vmatmul.mubr.f32.gmra.mxu0 %v1989
    %v2060 = vpop.f32.mrf.mxu0
    %v2061 = vadd.f32 %v1987, %v2060
    %v2062 = vpop.f32.mrf.mxu0
    %2063 = vmatprep.mubr.f32.mxu0 0.0
    %2064 = vmatmul.mubr.f32.gmra.mxu0 %v1992
    %v2065 = vpop.f32.mrf.mxu0
    %v2066 = vadd.f32 %v1987, %v2065
    %v2067 = vpop.f32.mrf.mxu0
    %2068 = vdwg.mxu0
    %v2069 = vadd.f32 %v1213, %v2061
    %v2070 = vadd.f32 %v1214, %v2066
    %v2071 = vsel %vm78, %v2069, 0.0
    %2072 = vadd.xlane.f32.xlu0 %v2071
    %v2073 = vpop.xlane.xlu0 %2072
    %v2074 = vsel %vm78, %v2070, 0.0
    %2075 = vadd.xlane.f32.xlu0 %v2074
    %v2076 = vpop.xlane.xlu0 %2075
    %v2077 = vmul.f32 %v2073, %v941
    %v2078 = vmul.f32 %v2076, %v941
    %v2079 = vsub.f32 %v2069, %v2077
    %v2080 = vsub.f32 %v2070, %v2078
    %v2081 = vmul.f32 %v2079, %v2079
    %v2082 = vmul.f32 %v2080, %v2080
    %v2083 = vsel %vm78, %v2081, 0.0
    %2084 = vadd.xlane.f32.xlu0 %v2083
    %v2085 = vpop.xlane.xlu0 %2084
    %v2086 = vsel %vm78, %v2082, 0.0
    %2087 = vadd.xlane.f32.xlu0 %v2086
    %v2088 = vpop.xlane.xlu0 %2087
    %v2089 = vmul.f32 %v2085, %v941
    %v2090 = vmul.f32 %v2088, %v941
    %v2091 = vadd.f32 %v2089, 1e-05
    %v2092 = vadd.f32 %v2090, 1e-05
    %v2093 = vrsqrt.pop %v2091
    %v2094 = vrsqrt.pop %v2092
    %v2095 = vmul.f32 %v2079, %v2093
    %v2096 = vmul.f32 %v2080, %v2094
    %v2097 = vlaneseq
    %v2098 = vshrl.u32 %v2097, 7
    %v2099 = vsub.s32 2, %v2098
    %v2100 = vrot.slane %v1216, %v2099
    %v2101 = vmul.f32 %v2095, %v2100
    %v2102 = vmul.f32 %v2096, %v2100
    %v2103 = vlaneseq
    %v2104 = vshrl.u32 %v2103, 7
    %v2105 = vsub.s32 3, %v2104
    %v2106 = vrot.slane %v1216, %v2105
    %v2107 = vadd.f32 %v2101, %v2106
    %v2108 = vadd.f32 %v2102, %v2106
    %s2109 = scalar_lea.vmem %s5, 32
    %v2110 = vld [vmem:[%s2109] sm:$0xff]
    %v2111 = vld [vmem:[%s2109 + $0x8] sm:$0xff]
    %v2112 = vld [vmem:[%s2109 + $0x10] sm:$0xff]
    %v2113 = vld [vmem:[%s2109 + $0x18] sm:$0xff]
    %v2114 = vlaneseq
    %v2115 = vshrl.u32 %v2114, 7
    %v2116 = vsub.s32 4, %v2115
    %v2117 = vrot.slane %v1216, %v2116
    %v2119 = vsel %vm78, %v2107, 0
    %v2122 = vsel %vm78, %v2108, 0
    %2124 = vmatprep.subr.mxu0 0.0
    %2125 = vmatpush1.msra.mxu0 0.0
    %2126 = vmatprep.subr.mxu0 0.0
    %2127 = vmatpush1.msra.mxu0 0.0
    %2128 = vmatprep.subr.mxu0 0.0
    %2129 = vmatpush1.msra.mxu0 0.0
    %2130 = vmatprep.subr.mxu0 0.0
    %2131 = vmatpush1.msra.mxu0 0.0
    %2132 = vmatprep.subr.mxu0 0.0
    %2133 = vmatpush1.msra.mxu0 0.0
    %2134 = vmatprep.subr.mxu0 0.0
    %2135 = vmatpush1.msra.mxu0 0.0
    %2136 = vmatprep.subr.mxu0 0.0
    %2137 = vmatpush1.msra.mxu0 0.0
    %2138 = vmatprep.subr.mxu0 0.0
    %2139 = vmatpush1.msra.mxu0 0.0
    %2140 = vmatprep.subr.mxu0 0.0
    %2141 = vmatpush1.msra.mxu0 0.0
    %2142 = vmatprep.subr.mxu0 0.0
    %2143 = vmatpush1.msra.mxu0 0.0
    %2144 = vmatprep.subr.mxu0 0.0
    %2145 = vmatpush1.msra.mxu0 0.0
    %2146 = vmatprep.subr.mxu0 0.0
    %2147 = vmatpush1.msra.mxu0 0.0
    %2148 = vmatprep.subr.mxu0 0.0
    %2149 = vmatpush1.msra.mxu0 %v2113
    %2150 = vmatprep.subr.mxu0 0.0
    %2151 = vmatpush1.msra.mxu0 %v2112
    %2152 = vmatprep.subr.mxu0 0.0
    %2153 = vmatpush1.msra.mxu0 %v2111
    %2154 = vmatprep.subr.mxu0 0.0
    %2155 = vmatpush1.msra.mxu0 %v2110
    %2156 = vmatprep.subr.mxu0 0.0
    %2157 = vmatpush2.msra.mxu0 0.0
    %2158 = vmatprep.subr.mxu0 0.0
    %2159 = vmatpush2.msra.mxu0 0.0
    %2160 = vmatprep.subr.mxu0 0.0
    %2161 = vmatpush2.msra.mxu0 0.0
    %2162 = vmatprep.subr.mxu0 0.0
    %2163 = vmatpush2.msra.mxu0 0.0
    %2164 = vmatprep.subr.mxu0 0.0
    %2165 = vmatpush2.msra.mxu0 0.0
    %2166 = vmatprep.subr.mxu0 0.0
    %2167 = vmatpush2.msra.mxu0 0.0
    %2168 = vmatprep.subr.mxu0 0.0
    %2169 = vmatpush2.msra.mxu0 0.0
    %2170 = vmatprep.subr.mxu0 0.0
    %2171 = vmatpush2.msra.mxu0 0.0
    %2172 = vmatprep.subr.mxu0 0.0
    %2173 = vmatpush2.msra.mxu0 0.0
    %2174 = vmatprep.subr.mxu0 0.0
    %2175 = vmatpush2.msra.mxu0 0.0
    %2176 = vmatprep.subr.mxu0 0.0
    %2177 = vmatpush2.msra.mxu0 0.0
    %2178 = vmatprep.subr.mxu0 0.0
    %2179 = vmatpush2.msra.mxu0 0.0
    %2180 = vmatprep.subr.mxu0 0.0
    %2181 = vmatpush2.msra.mxu0 0.0
    %2182 = vmatprep.subr.mxu0 0.0
    %2183 = vmatpush2.msra.mxu0 0.0
    %2184 = vmatprep.subr.mxu0 0.0
    %2185 = vmatpush2.msra.mxu0 0.0
    %2186 = vmatprep.subr.mxu0 0.0
    %2187 = vmatpush2.msra.mxu0 0.0
    %2188 = vmatprep.mubr.f32.mxu0 0.0
    %2189 = vmatmul.mubr.f32.gmra.mxu0 %v2119
    %v2190 = vpop.f32.mrf.mxu0
    %v2191 = vadd.f32 %v2117, %v2190
    %v2192 = vpop.f32.mrf.mxu0
    %2193 = vmatprep.mubr.f32.mxu0 0.0
    %2194 = vmatmul.mubr.f32.gmra.mxu0 %v2122
    %v2195 = vpop.f32.mrf.mxu0
    %v2196 = vadd.f32 %v2117, %v2195
    %v2197 = vpop.f32.mrf.mxu0
    %2198 = vdwg.mxu0
    %v2199 = vmul.f32 %v2191, 0.5
    %v2200 = vmul.f32 %v2196, 0.5
    %v2201 = vmul.f32 %v2191, 0.044715
    %v2202 = vmul.f32 %v2196, 0.044715
    %v2203 = vmul.f32 %v2201, %v2191
    %v2204 = vmul.f32 %v2202, %v2196
    %v2205 = vmul.f32 %v2203, %v2191
    %v2206 = vmul.f32 %v2204, %v2196
    %v2207 = vadd.f32 %v2191, %v2205
    %v2208 = vadd.f32 %v2196, %v2206
    %v2209 = vmul.f32 %v2207, 0.7978846
    %v2210 = vmul.f32 %v2208, 0.7978846
    %v2211 = vtanh.pop %v2209
    %v2212 = vtanh.pop %v2210
    %v2213 = vadd.f32 %v2211, 1.0
    %v2214 = vadd.f32 %v2212, 1.0
    %v2215 = vmul.f32 %v2199, %v2213
    %v2216 = vmul.f32 %v2200, %v2214
    %s2217 = scalar_lea.vmem %s6, 64
    %v2218 = vld [vmem:[%s2217] sm:$0xff]
    %v2219 = vld [vmem:[%s2217 + $0x8] sm:$0xff]
    %v2220 = vld [vmem:[%s2217 + $0x10] sm:$0xff]
    %v2221 = vld [vmem:[%s2217 + $0x18] sm:$0xff]
    %v2222 = vld [vmem:[%s2217 + $0x20] sm:$0xff]
    %v2223 = vld [vmem:[%s2217 + $0x28] sm:$0xff]
    %v2224 = vld [vmem:[%s2217 + $0x30] sm:$0xff]
    %v2225 = vld [vmem:[%s2217 + $0x38] sm:$0xff]
    %v2226 = vlaneseq
    %v2227 = vshrl.u32 %v2226, 7
    %v2228 = vsub.s32 5, %v2227
    %v2229 = vrot.slane %v1216, %v2228
    %v2231 = vsel %vm1093, %v2215, 0
    %v2234 = vsel %vm1093, %v2216, 0
    %2236 = vmatprep.subr.mxu0 0.0
    %2237 = vmatpush1.msra.mxu0 0.0
    %2238 = vmatprep.subr.mxu0 0.0
    %2239 = vmatpush1.msra.mxu0 0.0
    %2240 = vmatprep.subr.mxu0 0.0
    %2241 = vmatpush1.msra.mxu0 0.0
    %2242 = vmatprep.subr.mxu0 0.0
    %2243 = vmatpush1.msra.mxu0 0.0
    %2244 = vmatprep.subr.mxu0 0.0
    %2245 = vmatpush1.msra.mxu0 0.0
    %2246 = vmatprep.subr.mxu0 0.0
    %2247 = vmatpush1.msra.mxu0 0.0
    %2248 = vmatprep.subr.mxu0 0.0
    %2249 = vmatpush1.msra.mxu0 0.0
    %2250 = vmatprep.subr.mxu0 0.0
    %2251 = vmatpush1.msra.mxu0 0.0
    %2252 = vmatprep.subr.mxu0 0.0
    %2253 = vmatpush1.msra.mxu0 %v2225
    %2254 = vmatprep.subr.mxu0 0.0
    %2255 = vmatpush1.msra.mxu0 %v2224
    %2256 = vmatprep.subr.mxu0 0.0
    %2257 = vmatpush1.msra.mxu0 %v2223
    %2258 = vmatprep.subr.mxu0 0.0
    %2259 = vmatpush1.msra.mxu0 %v2222
    %2260 = vmatprep.subr.mxu0 0.0
    %2261 = vmatpush1.msra.mxu0 %v2221
    %2262 = vmatprep.subr.mxu0 0.0
    %2263 = vmatpush1.msra.mxu0 %v2220
    %2264 = vmatprep.subr.mxu0 0.0
    %2265 = vmatpush1.msra.mxu0 %v2219
    %2266 = vmatprep.subr.mxu0 0.0
    %2267 = vmatpush1.msra.mxu0 %v2218
    %2268 = vmatprep.subr.mxu0 0.0
    %2269 = vmatpush2.msra.mxu0 0.0
    %2270 = vmatprep.subr.mxu0 0.0
    %2271 = vmatpush2.msra.mxu0 0.0
    %2272 = vmatprep.subr.mxu0 0.0
    %2273 = vmatpush2.msra.mxu0 0.0
    %2274 = vmatprep.subr.mxu0 0.0
    %2275 = vmatpush2.msra.mxu0 0.0
    %2276 = vmatprep.subr.mxu0 0.0
    %2277 = vmatpush2.msra.mxu0 0.0
    %2278 = vmatprep.subr.mxu0 0.0
    %2279 = vmatpush2.msra.mxu0 0.0
    %2280 = vmatprep.subr.mxu0 0.0
    %2281 = vmatpush2.msra.mxu0 0.0
    %2282 = vmatprep.subr.mxu0 0.0
    %2283 = vmatpush2.msra.mxu0 0.0
    %2284 = vmatprep.subr.mxu0 0.0
    %2285 = vmatpush2.msra.mxu0 0.0
    %2286 = vmatprep.subr.mxu0 0.0
    %2287 = vmatpush2.msra.mxu0 0.0
    %2288 = vmatprep.subr.mxu0 0.0
    %2289 = vmatpush2.msra.mxu0 0.0
    %2290 = vmatprep.subr.mxu0 0.0
    %2291 = vmatpush2.msra.mxu0 0.0
    %2292 = vmatprep.subr.mxu0 0.0
    %2293 = vmatpush2.msra.mxu0 0.0
    %2294 = vmatprep.subr.mxu0 0.0
    %2295 = vmatpush2.msra.mxu0 0.0
    %2296 = vmatprep.subr.mxu0 0.0
    %2297 = vmatpush2.msra.mxu0 0.0
    %2298 = vmatprep.subr.mxu0 0.0
    %2299 = vmatpush2.msra.mxu0 0.0
    %2300 = vmatprep.mubr.f32.mxu0 0.0
    %2301 = vmatmul.mubr.f32.gmra.mxu0 %v2231
    %v2302 = vpop.f32.mrf.mxu0
    %v2303 = vadd.f32 %v2229, %v2302
    %v2304 = vpop.f32.mrf.mxu0
    %2305 = vmatprep.mubr.f32.mxu0 0.0
    %2306 = vmatmul.mubr.f32.gmra.mxu0 %v2234
    %v2307 = vpop.f32.mrf.mxu0
    %v2308 = vadd.f32 %v2229, %v2307
    %v2309 = vpop.f32.mrf.mxu0
    %2310 = vdwg.mxu0
    %v2311 = vadd.f32 %v2107, %v2303
    %v2312 = vadd.f32 %v2108, %v2308
    %v2313 = vsel %vm78, %v2311, 0.0
    %2314 = vadd.xlane.f32.xlu0 %v2313
    %v2315 = vpop.xlane.xlu0 %2314
    %v2316 = vsel %vm78, %v2312, 0.0
    %2317 = vadd.xlane.f32.xlu0 %v2316
    %v2318 = vpop.xlane.xlu0 %2317
    %v2319 = vmul.f32 %v2315, %v941
    %v2320 = vmul.f32 %v2318, %v941
    %v2321 = vsub.f32 %v2311, %v2319
    %v2322 = vsub.f32 %v2312, %v2320
    %v2323 = vmul.f32 %v2321, %v2321
    %v2324 = vmul.f32 %v2322, %v2322
    %v2325 = vsel %vm78, %v2323, 0.0
    %2326 = vadd.xlane.f32.xlu0 %v2325
    %v2327 = vpop.xlane.xlu0 %2326
    %v2328 = vsel %vm78, %v2324, 0.0
    %2329 = vadd.xlane.f32.xlu0 %v2328
    %v2330 = vpop.xlane.xlu0 %2329
    %v2331 = vmul.f32 %v2327, %v941
    %v2332 = vmul.f32 %v2330, %v941
    %v2333 = vadd.f32 %v2331, 1e-05
    %v2334 = vadd.f32 %v2332, 1e-05
    %v2335 = vrsqrt.pop %v2333
    %v2336 = vrsqrt.pop %v2334
    %v2337 = vmul.f32 %v2321, %v2335
    %v2338 = vmul.f32 %v2322, %v2336
    %v2339 = vlaneseq
    %v2340 = vshrl.u32 %v2339, 7
    %v2341 = vsub.s32 6, %v2340
    %v2342 = vrot.slane %v1216, %v2341
    %v2343 = vmul.f32 %v2337, %v2342
    %v2344 = vmul.f32 %v2338, %v2342
    %v2345 = vlaneseq
    %v2346 = vshrl.u32 %v2345, 7
    %v2347 = vsub.s32 7, %v2346
    %v2348 = vrot.slane %v1216, %v2347
    %v2349 = vadd.f32 %v2343, %v2348
    %v2350 = vadd.f32 %v2344, %v2348
    %v2352 = vrot.slane %v2350, 7
    %vm2354 = vcmask 1040384
    %v2355 = vsel %vm2354, %v2349, %v2352
    %v2356 = vld [vmem:[%s8] sm:$0xff]
    %v2357 = vld [vmem:[%s8 + $0x8] sm:$0xff]
    %v2358 = vld [vmem:[%s8 + $0x10] sm:$0xff]
    %v2359 = vld [vmem:[%s8 + $0x18] sm:$0xff]
    %v2360 = vld [vmem:[%s9] sm:$0x1]
    %v2362 = vlaneseq
    %v2363 = vshrl.u32 %v2362, 7
    %v2364 = vsub.s32 0, %v2363
    %v2365 = vrot.slane %v2360, %v2364
    %v2368 = vsel %vm78, %v2355, 0
    %2370 = vmatprep.subr.mxu0 0.0
    %2371 = vmatpush1.msra.mxu0 0.0
    %2372 = vmatprep.subr.mxu0 0.0
    %2373 = vmatpush1.msra.mxu0 0.0
    %2374 = vmatprep.subr.mxu0 0.0
    %2375 = vmatpush1.msra.mxu0 0.0
    %2376 = vmatprep.subr.mxu0 0.0
    %2377 = vmatpush1.msra.mxu0 0.0
    %2378 = vmatprep.subr.mxu0 0.0
    %2379 = vmatpush1.msra.mxu0 0.0
    %2380 = vmatprep.subr.mxu0 0.0
    %2381 = vmatpush1.msra.mxu0 0.0
    %2382 = vmatprep.subr.mxu0 0.0
    %2383 = vmatpush1.msra.mxu0 0.0
    %2384 = vmatprep.subr.mxu0 0.0
    %2385 = vmatpush1.msra.mxu0 0.0
    %2386 = vmatprep.subr.mxu0 0.0
    %2387 = vmatpush1.msra.mxu0 0.0
    %2388 = vmatprep.subr.mxu0 0.0
    %2389 = vmatpush1.msra.mxu0 0.0
    %2390 = vmatprep.subr.mxu0 0.0
    %2391 = vmatpush1.msra.mxu0 0.0
    %2392 = vmatprep.subr.mxu0 0.0
    %2393 = vmatpush1.msra.mxu0 0.0
    %2394 = vmatprep.subr.mxu0 0.0
    %2395 = vmatpush1.msra.mxu0 %v2359
    %2396 = vmatprep.subr.mxu0 0.0
    %2397 = vmatpush1.msra.mxu0 %v2358
    %2398 = vmatprep.subr.mxu0 0.0
    %2399 = vmatpush1.msra.mxu0 %v2357
    %2400 = vmatprep.subr.mxu0 0.0
    %2401 = vmatpush1.msra.mxu0 %v2356
    %2402 = vmatprep.subr.mxu0 0.0
    %2403 = vmatpush2.msra.mxu0 0.0
    %2404 = vmatprep.subr.mxu0 0.0
    %2405 = vmatpush2.msra.mxu0 0.0
    %2406 = vmatprep.subr.mxu0 0.0
    %2407 = vmatpush2.msra.mxu0 0.0
    %2408 = vmatprep.subr.mxu0 0.0
    %2409 = vmatpush2.msra.mxu0 0.0
    %2410 = vmatprep.subr.mxu0 0.0
    %2411 = vmatpush2.msra.mxu0 0.0
    %2412 = vmatprep.subr.mxu0 0.0
    %2413 = vmatpush2.msra.mxu0 0.0
    %2414 = vmatprep.subr.mxu0 0.0
    %2415 = vmatpush2.msra.mxu0 0.0
    %2416 = vmatprep.subr.mxu0 0.0
    %2417 = vmatpush2.msra.mxu0 0.0
    %2418 = vmatprep.subr.mxu0 0.0
    %2419 = vmatpush2.msra.mxu0 0.0
    %2420 = vmatprep.subr.mxu0 0.0
    %2421 = vmatpush2.msra.mxu0 0.0
    %2422 = vmatprep.subr.mxu0 0.0
    %2423 = vmatpush2.msra.mxu0 0.0
    %2424 = vmatprep.subr.mxu0 0.0
    %2425 = vmatpush2.msra.mxu0 0.0
    %2426 = vmatprep.subr.mxu0 0.0
    %2427 = vmatpush2.msra.mxu0 0.0
    %2428 = vmatprep.subr.mxu0 0.0
    %2429 = vmatpush2.msra.mxu0 0.0
    %2430 = vmatprep.subr.mxu0 0.0
    %2431 = vmatpush2.msra.mxu0 0.0
    %2432 = vmatprep.subr.mxu0 0.0
    %2433 = vmatpush2.msra.mxu0 0.0
    %2434 = vmatprep.mubr.f32.mxu0 0.0
    %2435 = vmatmul.mubr.f32.gmra.mxu0 %v2368
    %v2436 = vpop.f32.mrf.mxu0
    %v2437 = vadd.f32 %v2365, %v2436
    %v2438 = vpop.f32.mrf.mxu0
    %2439 = vdwg.mxu0
    %vm2440 = vcmask 123904
    %v2441 = vsel %vm2440, %v2437, 0.0
    %2442 = vadd.xlane.f32.xlu0 %v2441
    %v2443 = vpop.xlane.xlu0 %2442
    %v2444 = vrcp.pop 16.0
    %v2445 = vmul.f32 %v2443, %v2444
    %v2446 = vsub.f32 %v2437, %v2445
    %v2447 = vmul.f32 %v2446, %v2446
    %v2448 = vsel %vm2440, %v2447, 0.0
    %2449 = vadd.xlane.f32.xlu0 %v2448
    %v2450 = vpop.xlane.xlu0 %2449
    %v2451 = vmul.f32 %v2450, %v2444
    %v2452 = vadd.f32 %v2451, 1e-12
    %v2453 = vrsqrt.pop %v2452
    %v2454 = vmul.f32 %v2446, %v2453
    %2455 = vst.msk [vmem:[#allocation2] sm:$0x3] %vm2440, %v2454
    // Predicated region
    $region42: #{proj_encoder_forward.1} parent=1 // pred_check
      _
    $region43: #{proj_encoder_forward.1} parent=1 // pred_check_branch
      %2457 = sbr.rel (0) target = $region45
    $region44: #{proj_encoder_forward.1} parent=1 // pred_region
      %s2459 = ssub.s32 32, 32
      %2460 = vsyncadd [#allocation3], %s2459
      %s2462 = sshll.u32 [#allocation2], 4
      %s2463 = int_to_ptr.vmem [resolvable:$true] %s2462
      %2465 = dma.vmem_to_hbm [thread:$0]  %s2463, 32, %s10, [#allocation3]
    $region45: #{proj_encoder_forward.1} parent=1 // pred_fallthru
      _
    // Predicated region
    $region46: #{proj_encoder_forward.1} parent=1 // pred_check
      _
    $region47: #{proj_encoder_forward.1} parent=1 // pred_check_branch
      %2467 = sbr.rel (0) target = $region49
    $region48: #{proj_encoder_forward.1} parent=1 // pred_region
      %2468 = dma.done [#allocation3], 32
    $region49: #{proj_encoder_forward.1} parent=1 // pred_fallthru
      _
    %2469 = vsyncpa [#allocation3], 1

</llo_original>
